<compile_context>
chip_gen: v7x
topology: tpu7x:2x2x1
jax: 0.10.0
libtpu: 0.0.40
codegen_flags: <defaults>
</compile_context>

<pallas_src>
import jax
import jax.numpy as jnp
from jax.experimental import pallas as pl
from jax.experimental.pallas import tpu as pltpu

HIDDEN = 64          # hidden_size of warehouseBase
NUM_INPUTS = 73      # warehouse observation size
NUM_ACTIONS = 5      # Discrete(5) action space
DSET = [0] + list(range(49, 73))   # 25 manually-defined "influence" indices
GATE_STRIDE = 128                  # each GRU gate gets its own 128-lane block
GATE_W = 3 * GATE_STRIDE           # 384 packed gate width (r | z | n)
HEAD_W = 128                       # packed head width: actor(64) | value(1) | logits(5) | pad
STATE_W = 128                      # packed state slab: mask(1) | pad(63) | hxs(64)
OUT_W = 256                        # packed output slab: head(128) | hnew(64) | pad(64)
MAX_TB = 1024                      # batch-tile cap (usage ~16-20 MB VMEM at this cap)


def _iam_kernel(x_ref, state_ref,
                w1, w2, w3, b_fnn,           # fnn weights (bf16) + packed f32 biases (1,832)
                wi, wh, b_gru,               # packed GRU weights (f32) + biases (1,768)
                w_head, b_head,              # fused head weight (128,128) + bias (1,128)
                out_ref):
    f32 = jnp.float32
    bf16 = jnp.bfloat16
    x = x_ref[...]                                            # (TB, 73) f32

    # ---- fnn branch: 73 -> 512 -> 256 -> 64, ReLU; bf16 weights, f32 accumulation ----
    h1 = jnp.maximum(
        jnp.dot(x.astype(bf16), w1[...], preferred_element_type=f32) + b_fnn[:, 0:512], 0.0)
    h2 = jnp.maximum(
        jnp.dot(h1.astype(bf16), w2[...], preferred_element_type=f32) + b_fnn[:, 512:768], 0.0)
    fnn_out = jnp.maximum(
        jnp.dot(h2.astype(bf16), w3[...], preferred_element_type=f32) + b_fnn[:, 768:832], 0.0)

    # ---- single-step GRU on the dset features (gather folded into wi; 2 fused matmuls) ----
    state = state_ref[...]                                    # (TB, 128): [mask | pad | hxs]
    h0 = state[:, HIDDEN:2 * HIDDEN] * state[:, 0:1]          # hxs * masks, (TB, 64)
    gi = jnp.dot(x, wi[...], preferred_element_type=f32) + b_gru[:, 0:GATE_W]
    gh = jnp.dot(h0, wh[...], preferred_element_type=f32) + b_gru[:, GATE_W:2 * GATE_W]
    r = jax.nn.sigmoid(gi[:, 0:64] + gh[:, 0:64])
    z = jax.nn.sigmoid(gi[:, 128:192] + gh[:, 128:192])
    n = jnp.tanh(gi[:, 256:320] + r * gh[:, 256:320])
    hnew = (1.0 - z) * n + z * h0                             # (TB, 64), exact f32 path

    # ---- fused heads: single K=128 dot on [hnew | fnn_out]; one lane-dense 256-wide store ----
    xcat = jnp.concatenate([hnew, fnn_out], axis=-1)          # (TB, 128)
    head = jnp.dot(xcat, w_head[...], preferred_element_type=f32) + b_head[...]
    out_ref[...] = jnp.concatenate([head, hnew, jnp.zeros_like(hnew)], axis=-1)


def make_params(key):
    """Deterministic synthetic parameters matching warehouseBase/IAMPolicy shapes."""
    def lin(k, fan_in, fan_out, scale=0.05):
        kw, = jax.random.split(k, 1)
        w = scale * jax.random.normal(kw, (fan_in, fan_out), jnp.float32)
        b = jnp.zeros((1, fan_out), jnp.float32)
        return w, b

    keys = jax.random.split(key, 16)
    p = {}
    # fnn: Linear(73,512) ReLU, Linear(512,256) ReLU, Linear(256,64) ReLU
    p["w1"], p["b1"] = lin(keys[0], NUM_INPUTS, 512)
    p["w2"], p["b2"] = lin(keys[1], 512, 256)
    p["w3"], p["b3"] = lin(keys[2], 256, HIDDEN)
    # GRU(25 -> 64), gates ordered r, z, n as in nn.GRU; biases init to 0
    p["wir"], p["bir"] = lin(keys[3], 25, HIDDEN)
    p["wiz"], p["biz"] = lin(keys[4], 25, HIDDEN)
    p["win"], p["bin"] = lin(keys[5], 25, HIDDEN)
    p["whr"], p["bhr"] = lin(keys[6], HIDDEN, HIDDEN)
    p["whz"], p["bhz"] = lin(keys[7], HIDDEN, HIDDEN)
    p["whn"], p["bhn"] = lin(keys[8], HIDDEN, HIDDEN)
    # actor: Linear(128,64); critic: Linear(128,1); dist (Categorical): Linear(64, A)
    p["wa"], p["ba"] = lin(keys[9], 2 * HIDDEN, HIDDEN)
    p["wc"], p["bc"] = lin(keys[10], 2 * HIDDEN, 1)
    p["wd"], p["bd"] = lin(keys[11], HIDDEN, NUM_ACTIONS)
    return p


def pack_params(p):
    """Pack raw (module-layout) parameters into the fused kernel layout. Call once."""
    f32 = jnp.float32
    dset = jnp.array(DSET, dtype=jnp.int32)

    # GRU: gate g lives at columns [g*128, g*128+64); dset gather folded into wi rows.
    wi = jnp.zeros((NUM_INPUTS, GATE_W), f32)
    wh = jnp.zeros((HIDDEN, GATE_W), f32)
    b_gru = jnp.zeros((1, 2 * GATE_W), f32)
    gates = [("wir", "whr", "bir", "bhr"),
             ("wiz", "whz", "biz", "bhz"),
             ("win", "whn", "bin", "bhn")]
    for g, (wik, whk, bik, bhk) in enumerate(gates):
        c = g * GATE_STRIDE
        wi = wi.at[dset, c:c + HIDDEN].set(p[wik])
        wh = wh.at[:, c:c + HIDDEN].set(p[whk])
        b_gru = b_gru.at[:, c:c + HIDDEN].set(p[bik])
        b_gru = b_gru.at[:, GATE_W + c:GATE_W + c + HIDDEN].set(p[bhk])

    # Fused heads; input rows ordered [hnew(0:64) | fnn_out(64:128)] to match xcat.
    # Logits pre-composed: actor@wd + bd == xcat@(wa@wd) + (ba@wd + bd).
    w_head = jnp.zeros((2 * HIDDEN, HEAD_W), f32)
    w_head = w_head.at[:, 0:HIDDEN].set(p["wa"])
    w_head = w_head.at[:, HIDDEN:HIDDEN + 1].set(p["wc"])
    w_head = w_head.at[:, HIDDEN + 1:HIDDEN + 1 + NUM_ACTIONS].set(p["wa"] @ p["wd"])
    b_head = jnp.zeros((1, HEAD_W), f32)
    b_head = b_head.at[:, 0:HIDDEN].set(p["ba"])
    b_head = b_head.at[:, HIDDEN:HIDDEN + 1].set(p["bc"])
    b_head = b_head.at[:, HIDDEN + 1:HIDDEN + 1 + NUM_ACTIONS].set(p["ba"] @ p["wd"] + p["bd"])

    b_fnn = jnp.concatenate([p["b1"], p["b2"], p["b3"]], axis=1)   # (1, 832), 128-aligned slices

    return dict(
        w1=p["w1"].astype(jnp.bfloat16), w2=p["w2"].astype(jnp.bfloat16),
        w3=p["w3"].astype(jnp.bfloat16), b_fnn=b_fnn,
        wi=wi, wh=wh, b_gru=b_gru, w_head=w_head, b_head=b_head)


def _cdiv(a, b):
    return -(-a // b)


def _round_up(a, m):
    return (a + m - 1) // m * m


@jax.jit
def iam_forward_pallas(inputs, rnn_hxs, masks, pp):
    B = inputs.shape[0]
    # Tile chooser: pick the tile from the number of tiles so row padding stays < 8, cap the
    # tile at MAX_TB, and force >= 2 grid steps when B > 8 so the "parallel" batch axis can be
    # sharded across v7x's two TensorCores (extra step is ~0.35us noise on v5e/v6e).
    n_tiles = max(_cdiv(B, MAX_TB), 2 if B > 8 else 1)
    tb = _round_up(_cdiv(B, n_tiles), 8)
    bp = _round_up(B, tb)
    grid = (bp // tb,)

    # Lane-dense packed recurrent-state slab: [mask(1) | pad(63) | hxs(64)].
    state = jnp.concatenate(
        [masks, jnp.zeros((B, STATE_W - HIDDEN - 1), jnp.float32), rnn_hxs], axis=1)
    if bp != B:
        pad = ((0, bp - B), (0, 0))
        inputs = jnp.pad(inputs, pad)
        state = jnp.pad(state, pad)     # padded rows: mask=0, hxs=0 -> h0=0, no NaN leakage

    def rows(feat):
        return pl.BlockSpec((tb, feat), lambda i: (i, 0))

    def whole(arr):                     # full-array block, resident across the batch grid
        return pl.BlockSpec(arr.shape, lambda i: (0, 0))

    args = (inputs, state,
            pp["w1"], pp["w2"], pp["w3"], pp["b_fnn"],
            pp["wi"], pp["wh"], pp["b_gru"], pp["w_head"], pp["b_head"])
    in_specs = [rows(NUM_INPUTS), rows(STATE_W)] + [whole(a) for a in args[2:]]
    out_specs = rows(OUT_W)
    out_shape = jax.ShapeDtypeStruct((bp, OUT_W), jnp.float32)   # single lane-dense output slab

    flops = 2 * bp * (NUM_INPUTS * 512 + 512 * 256 + 256 * HIDDEN
                      + NUM_INPUTS * GATE_W + HIDDEN * GATE_W + 2 * HIDDEN * HEAD_W)
    weight_bytes = sum(int(a.size) * a.dtype.itemsize for a in args[2:])
    act_bytes = 4 * bp * (NUM_INPUTS + STATE_W + OUT_W)
    cost = pl.CostEstimate(flops=flops, transcendentals=3 * HIDDEN * bp,
                           bytes_accessed=weight_bytes + act_bytes)

    slab = pl.pallas_call(
        _iam_kernel,
        grid=grid,
        in_specs=in_specs,
        out_specs=out_specs,
        out_shape=out_shape,
        compiler_params=pltpu.CompilerParams(
            dimension_semantics=("parallel",),
            vmem_limit_bytes=32 << 20),
        cost_estimate=cost,
    )(*args)

    slab = slab[:B]
    actor = slab[:, 0:HIDDEN]
    value = slab[:, HIDDEN:HIDDEN + 1]
    logits = slab[:, HIDDEN + 1:HIDDEN + 1 + NUM_ACTIONS]
    new_hxs = slab[:, HEAD_W:HEAD_W + HIDDEN]
    return value, actor, new_hxs, logits


def iam_forward_ref(inputs, rnn_hxs, masks, p):
    """Pure-JAX f32 reference mirroring warehouseBase.forward + Categorical logits."""
    x = inputs
    h1 = jax.nn.relu(x @ p["w1"] + p["b1"])
    h2 = jax.nn.relu(h1 @ p["w2"] + p["b2"])
    fnn_out = jax.nn.relu(h2 @ p["w3"] + p["b3"])

    xr = x[:, jnp.array(DSET, dtype=jnp.int32)]
    h0 = rnn_hxs * masks
    r = jax.nn.sigmoid(xr @ p["wir"] + p["bir"] + h0 @ p["whr"] + p["bhr"])
    z = jax.nn.sigmoid(xr @ p["wiz"] + p["biz"] + h0 @ p["whz"] + p["bhz"])
    n = jnp.tanh(xr @ p["win"] + p["bin"] + r * (h0 @ p["whn"] + p["bhn"]))
    hnew = (1.0 - z) * n + z * h0

    xcat = jnp.concatenate([hnew, fnn_out], axis=1)
    value = xcat @ p["wc"] + p["bc"]
    actor = xcat @ p["wa"] + p["ba"]
    logits = actor @ p["wd"] + p["bd"]
    return value, actor, hnew, logits


if __name__ == "__main__":
    key = jax.random.PRNGKey(0)
    k_obs, k_hxs, k_par = jax.random.split(key, 3)
    params = make_params(k_par)
    packed = jax.block_until_ready(pack_params(params))       # one-time param packing

    # B=8: single-tile path (grid=1). B=300: multi-tile padded path (tb=152, grid=2, pad=4 rows).
    for B in (8, 300):
        inputs = jax.random.uniform(jax.random.fold_in(k_obs, B), (B, NUM_INPUTS), jnp.float32)
        rnn_hxs = 0.1 * jax.random.normal(jax.random.fold_in(k_hxs, B), (B, HIDDEN), jnp.float32)
        masks = jnp.ones((B, 1), jnp.float32).at[0, 0].set(0.0)   # one episode reset

        value, actor_feat, new_hxs, logits = jax.block_until_ready(
            iam_forward_pallas(inputs, rnn_hxs, masks, packed))

        # Correctness: GRU / hxs path is all-f32 -> tight check; fnn weights are bf16 (and the
        # logits head is pre-composed), so value/actor/logits get a looser tolerance.
        v_r, a_r, h_r, l_r = iam_forward_ref(inputs, rnn_hxs, masks, params)
        assert jnp.allclose(new_hxs, h_r, rtol=1e-4, atol=1e-4), f"hxs mismatch B={B}"
        assert jnp.allclose(value, v_r, rtol=3e-2, atol=3e-2), f"value mismatch B={B}"
        assert jnp.allclose(actor_feat, a_r, rtol=3e-2, atol=3e-2), f"actor mismatch B={B}"
        assert jnp.allclose(logits, l_r, rtol=3e-2, atol=3e-2), f"logits mismatch B={B}"

    # IAMPolicy.act (deterministic=True) glue: Categorical mode + log-probs.
    action = jnp.argmax(logits, axis=-1)
    log_probs = jax.nn.log_softmax(logits, axis=-1)
    action_log_probs = jnp.take_along_axis(log_probs, action[:, None], axis=1)
    # TODO(synk): stochastic dist.sample() / entropy.mean() omitted (RNG sampling glue, not kernel work).

    jax.block_until_ready((value, action, action_log_probs, new_hxs))
    print("KERNEL_OK")
</pallas_src>

<mosaic_0001>
module attributes {stable_mosaic.version = 11 : i64} {
  func.func @_iam_kernel(%arg0: i32, %arg1: memref<8x73xf32, #tpu.memory_space<vmem>>, %arg2: memref<8x128xf32, #tpu.memory_space<vmem>>, %arg3: memref<73x512xbf16, #tpu.memory_space<vmem>>, %arg4: memref<512x256xbf16, #tpu.memory_space<vmem>>, %arg5: memref<256x64xbf16, #tpu.memory_space<vmem>>, %arg6: memref<1x832xf32, #tpu.memory_space<vmem>>, %arg7: memref<73x384xf32, #tpu.memory_space<vmem>>, %arg8: memref<64x384xf32, #tpu.memory_space<vmem>>, %arg9: memref<1x768xf32, #tpu.memory_space<vmem>>, %arg10: memref<128x128xf32, #tpu.memory_space<vmem>>, %arg11: memref<1x128xf32, #tpu.memory_space<vmem>>, %arg12: memref<8x256xf32, #tpu.memory_space<vmem>>) attributes {dimension_semantics = [#tpu.dimension_semantics<parallel>], iteration_bounds = array<i64: 1>, scalar_prefetch = 0 : i64, scratch_operands = 0 : i64, tpu.core_type = #tpu.core_type<tc>, window_params = [{transform_indices = @transform_0, window_bounds = array<i64: 8, 73>}, {transform_indices = @transform_1, window_bounds = array<i64: 8, 128>}, {pipeline_mode = #tpu.pipeline_mode<synchronous>, transform_indices = @transform_2, window_bounds = array<i64: 73, 512>}, {pipeline_mode = #tpu.pipeline_mode<synchronous>, transform_indices = @transform_3, window_bounds = array<i64: 512, 256>}, {pipeline_mode = #tpu.pipeline_mode<synchronous>, transform_indices = @transform_4, window_bounds = array<i64: 256, 64>}, {pipeline_mode = #tpu.pipeline_mode<synchronous>, transform_indices = @transform_5, window_bounds = array<i64: 1, 832>}, {pipeline_mode = #tpu.pipeline_mode<synchronous>, transform_indices = @transform_6, window_bounds = array<i64: 73, 384>}, {pipeline_mode = #tpu.pipeline_mode<synchronous>, transform_indices = @transform_7, window_bounds = array<i64: 64, 384>}, {pipeline_mode = #tpu.pipeline_mode<synchronous>, transform_indices = @transform_8, window_bounds = array<i64: 1, 768>}, {pipeline_mode = #tpu.pipeline_mode<synchronous>, transform_indices = @transform_9, window_bounds = array<i64: 128, 128>}, {pipeline_mode = #tpu.pipeline_mode<synchronous>, transform_indices = @transform_10, window_bounds = array<i64: 1, 128>}, {transform_indices = @transform_11, window_bounds = array<i64: 8, 256>}]} {
    %c0 = arith.constant 0 : index
    %c0_0 = arith.constant 0 : index
    %0 = vector.load %arg1[%c0, %c0_0] : memref<8x73xf32, #tpu.memory_space<vmem>>, vector<8x73xf32>
    %1 = arith.truncf %0 : vector<8x73xf32> to vector<8x73xbf16>
    %c0_1 = arith.constant 0 : index
    %c0_2 = arith.constant 0 : index
    %2 = vector.load %arg3[%c0_1, %c0_2] : memref<73x512xbf16, #tpu.memory_space<vmem>>, vector<73x512xbf16>
    %cst = arith.constant dense<0.000000e+00> : vector<8x512xf32>
    %3 = tpu.matmul %1, %2, %cst {dimension_numbers = #tpu.dot_dimension_numbers<[1], [0], [0], [1], [0, 0, 1, 1], [], []>} : vector<8x73xbf16>, vector<73x512xbf16>, vector<8x512xf32> -> vector<8x512xf32>
    %c0_3 = arith.constant 0 : index
    %c0_4 = arith.constant 0 : index
    %4 = vector.load %arg6[%c0_3, %c0_4] : memref<1x832xf32, #tpu.memory_space<vmem>>, vector<1x512xf32>
    %5 = vector.broadcast %4 : vector<1x512xf32> to vector<8x512xf32>
    %6 = arith.addf %3, %5 : vector<8x512xf32>
    %cst_5 = arith.constant 0.000000e+00 : f32
    %7 = vector.broadcast %cst_5 : f32 to vector<8x512xf32>
    %8 = arith.maximumf %6, %7 : vector<8x512xf32>
    %9 = arith.truncf %8 : vector<8x512xf32> to vector<8x512xbf16>
    %c0_6 = arith.constant 0 : index
    %c0_7 = arith.constant 0 : index
    %10 = vector.load %arg4[%c0_6, %c0_7] : memref<512x256xbf16, #tpu.memory_space<vmem>>, vector<512x256xbf16>
    %cst_8 = arith.constant dense<0.000000e+00> : vector<8x256xf32>
    %11 = tpu.matmul %9, %10, %cst_8 {dimension_numbers = #tpu.dot_dimension_numbers<[1], [0], [0], [1], [0, 0, 1, 1], [], []>} : vector<8x512xbf16>, vector<512x256xbf16>, vector<8x256xf32> -> vector<8x256xf32>
    %c0_9 = arith.constant 0 : index
    %c512 = arith.constant 512 : index
    %12 = vector.load %arg6[%c0_9, %c512] : memref<1x832xf32, #tpu.memory_space<vmem>>, vector<1x256xf32>
    %13 = vector.broadcast %12 : vector<1x256xf32> to vector<8x256xf32>
    %14 = arith.addf %11, %13 : vector<8x256xf32>
    %cst_10 = arith.constant 0.000000e+00 : f32
    %15 = vector.broadcast %cst_10 : f32 to vector<8x256xf32>
    %16 = arith.maximumf %14, %15 : vector<8x256xf32>
    %17 = arith.truncf %16 : vector<8x256xf32> to vector<8x256xbf16>
    %c0_11 = arith.constant 0 : index
    %c0_12 = arith.constant 0 : index
    %18 = vector.load %arg5[%c0_11, %c0_12] : memref<256x64xbf16, #tpu.memory_space<vmem>>, vector<256x64xbf16>
    %cst_13 = arith.constant dense<0.000000e+00> : vector<8x64xf32>
    %19 = tpu.matmul %17, %18, %cst_13 {dimension_numbers = #tpu.dot_dimension_numbers<[1], [0], [0], [1], [0, 0, 1, 1], [], []>} : vector<8x256xbf16>, vector<256x64xbf16>, vector<8x64xf32> -> vector<8x64xf32>
    %c0_14 = arith.constant 0 : index
    %c768 = arith.constant 768 : index
    %20 = vector.load %arg6[%c0_14, %c768] : memref<1x832xf32, #tpu.memory_space<vmem>>, vector<1x64xf32>
    %21 = vector.broadcast %20 : vector<1x64xf32> to vector<8x64xf32>
    %22 = arith.addf %19, %21 : vector<8x64xf32>
    %cst_15 = arith.constant 0.000000e+00 : f32
    %23 = vector.broadcast %cst_15 : f32 to vector<8x64xf32>
    %24 = arith.maximumf %22, %23 : vector<8x64xf32>
    %c0_16 = arith.constant 0 : index
    %c0_17 = arith.constant 0 : index
    %25 = vector.load %arg2[%c0_16, %c0_17] : memref<8x128xf32, #tpu.memory_space<vmem>>, vector<8x128xf32>
    %26 = vector.extract_strided_slice %25 {offsets = [0, 64], sizes = [8, 64], strides = [1, 1]} : vector<8x128xf32> to vector<8x64xf32>
    %27 = vector.extract_strided_slice %25 {offsets = [0, 0], sizes = [8, 1], strides = [1, 1]} : vector<8x128xf32> to vector<8x1xf32>
    %28 = vector.broadcast %27 : vector<8x1xf32> to vector<8x64xf32>
    %29 = arith.mulf %26, %28 : vector<8x64xf32>
    %c0_18 = arith.constant 0 : index
    %c0_19 = arith.constant 0 : index
    %30 = vector.load %arg7[%c0_18, %c0_19] : memref<73x384xf32, #tpu.memory_space<vmem>>, vector<73x384xf32>
    %cst_20 = arith.constant dense<0.000000e+00> : vector<8x384xf32>
    %31 = tpu.matmul %0, %30, %cst_20 {dimension_numbers = #tpu.dot_dimension_numbers<[1], [0], [0], [1], [0, 0, 1, 1], [], []>} : vector<8x73xf32>, vector<73x384xf32>, vector<8x384xf32> -> vector<8x384xf32>
    %c0_21 = arith.constant 0 : index
    %c0_22 = arith.constant 0 : index
    %32 = vector.load %arg9[%c0_21, %c0_22] : memref<1x768xf32, #tpu.memory_space<vmem>>, vector<1x384xf32>
    %33 = vector.broadcast %32 : vector<1x384xf32> to vector<8x384xf32>
    %34 = arith.addf %31, %33 : vector<8x384xf32>
    %c0_23 = arith.constant 0 : index
    %c0_24 = arith.constant 0 : index
    %35 = vector.load %arg8[%c0_23, %c0_24] : memref<64x384xf32, #tpu.memory_space<vmem>>, vector<64x384xf32>
    %cst_25 = arith.constant dense<0.000000e+00> : vector<8x384xf32>
    %36 = tpu.matmul %29, %35, %cst_25 {dimension_numbers = #tpu.dot_dimension_numbers<[1], [0], [0], [1], [0, 0, 1, 1], [], []>} : vector<8x64xf32>, vector<64x384xf32>, vector<8x384xf32> -> vector<8x384xf32>
    %c0_26 = arith.constant 0 : index
    %c384 = arith.constant 384 : index
    %37 = vector.load %arg9[%c0_26, %c384] : memref<1x768xf32, #tpu.memory_space<vmem>>, vector<1x384xf32>
    %38 = vector.broadcast %37 : vector<1x384xf32> to vector<8x384xf32>
    %39 = arith.addf %36, %38 : vector<8x384xf32>
    %40 = vector.extract_strided_slice %34 {offsets = [0, 0], sizes = [8, 64], strides = [1, 1]} : vector<8x384xf32> to vector<8x64xf32>
    %41 = vector.extract_strided_slice %39 {offsets = [0, 0], sizes = [8, 64], strides = [1, 1]} : vector<8x384xf32> to vector<8x64xf32>
    %42 = arith.addf %40, %41 : vector<8x64xf32>
    %43 = arith.negf %42 : vector<8x64xf32>
    %44 = math.exp %43 : vector<8x64xf32>
    %cst_27 = arith.constant 1.000000e+00 : f32
    %45 = vector.broadcast %cst_27 : f32 to vector<8x64xf32>
    %46 = arith.addf %45, %44 : vector<8x64xf32>
    %47 = arith.divf %45, %46 : vector<8x64xf32>
    %48 = vector.extract_strided_slice %34 {offsets = [0, 128], sizes = [8, 64], strides = [1, 1]} : vector<8x384xf32> to vector<8x64xf32>
    %49 = vector.extract_strided_slice %39 {offsets = [0, 128], sizes = [8, 64], strides = [1, 1]} : vector<8x384xf32> to vector<8x64xf32>
    %50 = arith.addf %48, %49 : vector<8x64xf32>
    %51 = arith.negf %50 : vector<8x64xf32>
    %52 = math.exp %51 : vector<8x64xf32>
    %cst_28 = arith.constant 1.000000e+00 : f32
    %53 = vector.broadcast %cst_28 : f32 to vector<8x64xf32>
    %54 = arith.addf %53, %52 : vector<8x64xf32>
    %55 = arith.divf %53, %54 : vector<8x64xf32>
    %56 = vector.extract_strided_slice %34 {offsets = [0, 256], sizes = [8, 64], strides = [1, 1]} : vector<8x384xf32> to vector<8x64xf32>
    %57 = vector.extract_strided_slice %39 {offsets = [0, 256], sizes = [8, 64], strides = [1, 1]} : vector<8x384xf32> to vector<8x64xf32>
    %58 = arith.mulf %47, %57 : vector<8x64xf32>
    %59 = arith.addf %56, %58 : vector<8x64xf32>
    %60 = math.tanh %59 : vector<8x64xf32>
    %cst_29 = arith.constant 1.000000e+00 : f32
    %61 = vector.broadcast %cst_29 : f32 to vector<8x64xf32>
    %62 = arith.subf %61, %55 : vector<8x64xf32>
    %63 = arith.mulf %62, %60 : vector<8x64xf32>
    %64 = arith.mulf %55, %29 : vector<8x64xf32>
    %65 = arith.addf %63, %64 : vector<8x64xf32>
    %66 = tpu.concatenate %65, %24 in 1 : vector<8x64xf32>, vector<8x64xf32> -> vector<8x128xf32>
    %c0_30 = arith.constant 0 : index
    %c0_31 = arith.constant 0 : index
    %67 = vector.load %arg10[%c0_30, %c0_31] : memref<128x128xf32, #tpu.memory_space<vmem>>, vector<128x128xf32>
    %cst_32 = arith.constant dense<0.000000e+00> : vector<8x128xf32>
    %68 = tpu.matmul %66, %67, %cst_32 {dimension_numbers = #tpu.dot_dimension_numbers<[1], [0], [0], [1], [0, 0, 1, 1], [], []>} : vector<8x128xf32>, vector<128x128xf32>, vector<8x128xf32> -> vector<8x128xf32>
    %c0_33 = arith.constant 0 : index
    %c0_34 = arith.constant 0 : index
    %69 = vector.load %arg11[%c0_33, %c0_34] : memref<1x128xf32, #tpu.memory_space<vmem>>, vector<1x128xf32>
    %70 = vector.broadcast %69 : vector<1x128xf32> to vector<8x128xf32>
    %71 = arith.addf %68, %70 : vector<8x128xf32>
    %cst_35 = arith.constant 0.000000e+00 : f32
    %72 = vector.broadcast %cst_35 : f32 to vector<8x64xf32>
    %73 = tpu.concatenate %71, %65, %72 in 1 : vector<8x128xf32>, vector<8x64xf32>, vector<8x64xf32> -> vector<8x256xf32>
    %c0_36 = arith.constant 0 : index
    %c0_37 = arith.constant 0 : index
    %74 = vector.load %arg12[%c0_36, %c0_37] : memref<8x256xf32, #tpu.memory_space<vmem>>, vector<8x256xf32>
    tpu.vector_store %arg12[%c0_36, %c0_37], %73 {strides = array<i32>} : memref<8x256xf32, #tpu.memory_space<vmem>>, vector<8x256xf32>,
    return
  }
  func.func @transform_0(%arg0: i32) -> (i32, i32) {
    %c0_i32 = arith.constant 0 : i32
    %c0_i32_0 = arith.constant 0 : i32
    return %arg0, %c0_i32 : i32, i32
  }
  func.func @transform_1(%arg0: i32) -> (i32, i32) {
    %c0_i32 = arith.constant 0 : i32
    %c0_i32_0 = arith.constant 0 : i32
    return %arg0, %c0_i32 : i32, i32
  }
  func.func @transform_2(%arg0: i32) -> (i32, i32) {
    %c0_i32 = arith.constant 0 : i32
    %c0_i32_0 = arith.constant 0 : i32
    %c0_i32_1 = arith.constant 0 : i32
    return %c0_i32, %c0_i32_0 : i32, i32
  }
  func.func @transform_3(%arg0: i32) -> (i32, i32) {
    %c0_i32 = arith.constant 0 : i32
    %c0_i32_0 = arith.constant 0 : i32
    %c0_i32_1 = arith.constant 0 : i32
    return %c0_i32, %c0_i32_0 : i32, i32
  }
  func.func @transform_4(%arg0: i32) -> (i32, i32) {
    %c0_i32 = arith.constant 0 : i32
    %c0_i32_0 = arith.constant 0 : i32
    %c0_i32_1 = arith.constant 0 : i32
    return %c0_i32, %c0_i32_0 : i32, i32
  }
  func.func @transform_5(%arg0: i32) -> (i32, i32) {
    %c0_i32 = arith.constant 0 : i32
    %c0_i32_0 = arith.constant 0 : i32
    %c0_i32_1 = arith.constant 0 : i32
    return %c0_i32, %c0_i32_0 : i32, i32
  }
  func.func @transform_6(%arg0: i32) -> (i32, i32) {
    %c0_i32 = arith.constant 0 : i32
    %c0_i32_0 = arith.constant 0 : i32
    %c0_i32_1 = arith.constant 0 : i32
    return %c0_i32, %c0_i32_0 : i32, i32
  }
  func.func @transform_7(%arg0: i32) -> (i32, i32) {
    %c0_i32 = arith.constant 0 : i32
    %c0_i32_0 = arith.constant 0 : i32
    %c0_i32_1 = arith.constant 0 : i32
    return %c0_i32, %c0_i32_0 : i32, i32
  }
  func.func @transform_8(%arg0: i32) -> (i32, i32) {
    %c0_i32 = arith.constant 0 : i32
    %c0_i32_0 = arith.constant 0 : i32
    %c0_i32_1 = arith.constant 0 : i32
    return %c0_i32, %c0_i32_0 : i32, i32
  }
  func.func @transform_9(%arg0: i32) -> (i32, i32) {
    %c0_i32 = arith.constant 0 : i32
    %c0_i32_0 = arith.constant 0 : i32
    %c0_i32_1 = arith.constant 0 : i32
    return %c0_i32, %c0_i32_0 : i32, i32
  }
  func.func @transform_10(%arg0: i32) -> (i32, i32) {
    %c0_i32 = arith.constant 0 : i32
    %c0_i32_0 = arith.constant 0 : i32
    %c0_i32_1 = arith.constant 0 : i32
    return %c0_i32, %c0_i32_0 : i32, i32
  }
  func.func @transform_11(%arg0: i32) -> (i32, i32) {
    %c0_i32 = arith.constant 0 : i32
    %c0_i32_0 = arith.constant 0 : i32
    return %arg0, %c0_i32 : i32, i32
  }
}

</mosaic_0001>

<llo_original>
// kernel: iam_forward_pallas.1
$region0: #{iam_forward_pallas.1}
  #allocation0 [shape = 'u32[]', space=smem, size = 0x4, offset = 0x4, fixed_abs, tag = 'smem constant byte address 0x4 - core index']
  #allocation1 [shape = 'u32[144,128]{1,0:T(1,128)}', space=vmem, size = 0x12000, scoped, tag = 'internal scratch']
  %s0 = inlined_call_operand.vmem [shape: f32[8,73], index: 0, kind: input, shape index: {}]
  %s1 = inlined_call_operand.vmem [shape: f32[8,128], index: 1, kind: input, shape index: {}]
  %s2 = inlined_call_operand.hbm [shape: bf16[73,512], index: 2, kind: input, shape index: {}]
  %s3 = inlined_call_operand.hbm [shape: bf16[512,256], index: 3, kind: input, shape index: {}]
  %s4 = inlined_call_operand.vmem [shape: bf16[256,64], index: 4, kind: input, shape index: {}]
  %s5 = inlined_call_operand.vmem [shape: f32[1,832], index: 5, kind: input, shape index: {}]
  %s6 = inlined_call_operand.vmem [shape: f32[73,384], index: 6, kind: input, shape index: {}]
  %s7 = inlined_call_operand.hbm [shape: f32[64,384], index: 7, kind: input, shape index: {}]
  %s8 = inlined_call_operand.vmem [shape: f32[1,768], index: 8, kind: input, shape index: {}]
  %s9 = inlined_call_operand.hbm [shape: f32[128,128], index: 9, kind: input, shape index: {}]
  %s10 = inlined_call_operand.vmem [shape: f32[1,128], index: 10, kind: input, shape index: {}]
  %s11 = inlined_call_operand.vmem [shape: f32[8,256], index: 11, kind: output, shape index: {}]
  %s12 = sld [smem:[#allocation0]]
  $region70: #{iam_forward_pallas.1} parent=0
    _
  %s14 = ssub.s32 1, %s12
  %s15 = scalar_select 0, %s14, %s12
  $region1: #{iam_forward_pallas.1} parent=0
    #allocation2 [shape = 'u8[81920]{0}', space=vmem, size = 0x14000, scoped, tag = 'input window, operand 2, single buffered']
    #allocation3 [shape = 's32[1]{0}', space=sflag, size = 0x4, scoped, tag = 'scoped memory for iam_forward_pallas.1']
    #allocation4 [shape = 'u8[262144]{0}', space=vmem, size = 0x40000, scoped, tag = 'input window, operand 3, single buffered']
    #allocation5 [shape = 's32[1]{0}', space=sflag, size = 0x4, scoped, tag = 'scoped memory for iam_forward_pallas.1']
    #allocation6 [shape = 'u8[98304]{0}', space=vmem, size = 0x18000, scoped, tag = 'input window, operand 7, single buffered']
    #allocation7 [shape = 'u8[65536]{0}', space=vmem, size = 0x10000, scoped, tag = 'input window, operand 9, single buffered']
    #allocation8 [shape = 's32[1]{0}', space=sflag, size = 0x4, scoped, tag = 'scoped memory for iam_forward_pallas.1']
    %16 = vsyncpa [#allocation3], 0
    %17 = vsyncpa [#allocation5], 0
    %18 = vsyncpa [#allocation8], 0
    // Predicated region
    $region2: #{iam_forward_pallas.1} parent=1 // pred_check
      _
    $region3: #{iam_forward_pallas.1} parent=1 // pred_check_branch
      %20 = sbr.rel (0) target = $region5
    $region4: #{iam_forward_pallas.1} parent=1 // pred_region
      _
    $region5: #{iam_forward_pallas.1} parent=1 // pred_fallthru
      _
    // Predicated region
    $region6: #{iam_forward_pallas.1} parent=1 // pred_check
      _
    $region7: #{iam_forward_pallas.1} parent=1 // pred_check_branch
      %22 = sbr.rel (0) target = $region9
    $region8: #{iam_forward_pallas.1} parent=1 // pred_region
      _
    $region9: #{iam_forward_pallas.1} parent=1 // pred_fallthru
      _
    // Predicated region
    $region10: #{iam_forward_pallas.1} parent=1 // pred_check
      _
    $region11: #{iam_forward_pallas.1} parent=1 // pred_check_branch
      %24 = sbr.rel (0) target = $region13
    $region12: #{iam_forward_pallas.1} parent=1 // pred_region
      %s26 = ssub.s32 2560, 2560
      %27 = vsyncadd [#allocation3], %s26
      %s28 = sshll.u32 [#allocation2], 4
      %s29 = int_to_ptr.vmem [resolvable:$true] %s28
      %34 = dma.hbm_to_vmem [thread:$0]  %s2, 2560, %s29, [#allocation3], 256, 256, 16
    $region13: #{iam_forward_pallas.1} parent=1 // pred_fallthru
      _
    // Predicated region
    $region14: #{iam_forward_pallas.1} parent=1 // pred_check
      _
    $region15: #{iam_forward_pallas.1} parent=1 // pred_check_branch
      %36 = sbr.rel (0) target = $region17
    $region16: #{iam_forward_pallas.1} parent=1 // pred_region
      %s38 = ssub.s32 8192, 8192
      %39 = vsyncadd [#allocation5], %s38
      %s40 = sshll.u32 [#allocation4], 4
      %s41 = int_to_ptr.vmem [resolvable:$true] %s40
      %46 = dma.hbm_to_vmem [thread:$0]  %s3, 8192, %s41, [#allocation5], 128, 128, 8
    $region17: #{iam_forward_pallas.1} parent=1 // pred_fallthru
      _
    // Predicated region
    $region18: #{iam_forward_pallas.1} parent=1 // pred_check
      _
    $region19: #{iam_forward_pallas.1} parent=1 // pred_check_branch
      %48 = sbr.rel (0) target = $region21
    $region20: #{iam_forward_pallas.1} parent=1 // pred_region
      _
    $region21: #{iam_forward_pallas.1} parent=1 // pred_fallthru
      _
    // Predicated region
    $region22: #{iam_forward_pallas.1} parent=1 // pred_check
      _
    $region23: #{iam_forward_pallas.1} parent=1 // pred_check_branch
      %50 = sbr.rel (0) target = $region25
    $region24: #{iam_forward_pallas.1} parent=1 // pred_region
      _
    $region25: #{iam_forward_pallas.1} parent=1 // pred_fallthru
      _
    // Predicated region
    $region26: #{iam_forward_pallas.1} parent=1 // pred_check
      _
    $region27: #{iam_forward_pallas.1} parent=1 // pred_check_branch
      %52 = sbr.rel (0) target = $region29
    $region28: #{iam_forward_pallas.1} parent=1 // pred_region
      _
    $region29: #{iam_forward_pallas.1} parent=1 // pred_fallthru
      _
    // Predicated region
    $region30: #{iam_forward_pallas.1} parent=1 // pred_check
      _
    $region31: #{iam_forward_pallas.1} parent=1 // pred_check_branch
      %54 = sbr.rel (0) target = $region33
    $region32: #{iam_forward_pallas.1} parent=1 // pred_region
      %s56 = ssub.s32 3072, 3072
      %57 = vsyncadd [#allocation5], %s56
      %s58 = sshll.u32 [#allocation6], 4
      %s59 = int_to_ptr.vmem [resolvable:$true] %s58
      %64 = dma.hbm_to_vmem [thread:$0]  %s7, 3072, %s59, [#allocation5], 384, 384, 24
    $region33: #{iam_forward_pallas.1} parent=1 // pred_fallthru
      _
    // Predicated region
    $region34: #{iam_forward_pallas.1} parent=1 // pred_check
      _
    $region35: #{iam_forward_pallas.1} parent=1 // pred_check_branch
      %66 = sbr.rel (0) target = $region37
    $region36: #{iam_forward_pallas.1} parent=1 // pred_region
      _
    $region37: #{iam_forward_pallas.1} parent=1 // pred_fallthru
      _
    // Predicated region
    $region38: #{iam_forward_pallas.1} parent=1 // pred_check
      _
    $region39: #{iam_forward_pallas.1} parent=1 // pred_check_branch
      %68 = sbr.rel (0) target = $region41
    $region40: #{iam_forward_pallas.1} parent=1 // pred_region
      %s70 = ssub.s32 2048, 2048
      %71 = vsyncadd [#allocation8], %s70
      %s72 = sshll.u32 [#allocation7], 4
      %s73 = int_to_ptr.vmem [resolvable:$true] %s72
      %78 = dma.hbm_to_vmem [thread:$0]  %s9, 2048, %s73, [#allocation8], 128, 128, 8
    $region41: #{iam_forward_pallas.1} parent=1 // pred_fallthru
      _
    // Predicated region
    $region42: #{iam_forward_pallas.1} parent=1 // pred_check
      _
    $region43: #{iam_forward_pallas.1} parent=1 // pred_check_branch
      %80 = sbr.rel (0) target = $region45
    $region44: #{iam_forward_pallas.1} parent=1 // pred_region
      _
    $region45: #{iam_forward_pallas.1} parent=1 // pred_fallthru
      _
    // Predicated region
    $region46: #{iam_forward_pallas.1} parent=1 // pred_check
      _
    $region47: #{iam_forward_pallas.1} parent=1 // pred_check_branch
      %82 = sbr.rel (0) target = $region49
    $region48: #{iam_forward_pallas.1} parent=1 // pred_region
      %83 = dma.done [#allocation3], 2560
    $region49: #{iam_forward_pallas.1} parent=1 // pred_fallthru
      _
    // Predicated region
    $region50: #{iam_forward_pallas.1} parent=1 // pred_check
      _
    $region51: #{iam_forward_pallas.1} parent=1 // pred_check_branch
      %85 = sbr.rel (0) target = $region53
    $region52: #{iam_forward_pallas.1} parent=1 // pred_region
      %86 = dma.done [#allocation5], 8192
    $region53: #{iam_forward_pallas.1} parent=1 // pred_fallthru
      _
    // Predicated region
    $region54: #{iam_forward_pallas.1} parent=1 // pred_check
      _
    $region55: #{iam_forward_pallas.1} parent=1 // pred_check_branch
      %88 = sbr.rel (0) target = $region57
    $region56: #{iam_forward_pallas.1} parent=1 // pred_region
      %89 = dma.done [#allocation5], 3072
    $region57: #{iam_forward_pallas.1} parent=1 // pred_fallthru
      _
    // Predicated region
    $region58: #{iam_forward_pallas.1} parent=1 // pred_check
      _
    $region59: #{iam_forward_pallas.1} parent=1 // pred_check_branch
      %91 = sbr.rel (0) target = $region61
    $region60: #{iam_forward_pallas.1} parent=1 // pred_region
      %92 = dma.done [#allocation8], 2048
    $region61: #{iam_forward_pallas.1} parent=1 // pred_fallthru
      _
    %v94 = vld [vmem:[%s0] sm:$0xff]
    %v95 = vpack.c.bf16 %v94, %v94
    %v96 = vld [vmem:[#allocation2] sm:$0xff]
    %v97 = vld [vmem:[#allocation2 + $0x8] sm:$0xff]
    %v98 = vld [vmem:[#allocation2 + $0x10] sm:$0xff]
    %v99 = vld [vmem:[#allocation2 + $0x18] sm:$0xff]
    %v100 = vld [vmem:[#allocation2 + $0x20] sm:$0xff]
    %v101 = vld [vmem:[#allocation2 + $0x28] sm:$0xff]
    %v102 = vld [vmem:[#allocation2 + $0x30] sm:$0xff]
    %v103 = vld [vmem:[#allocation2 + $0x38] sm:$0xff]
    %v104 = vld [vmem:[#allocation2 + $0x40] sm:$0xff]
    %v105 = vld [vmem:[#allocation2 + $0x48] sm:$0xff]
    %v106 = vld [vmem:[#allocation2 + $0x50] sm:$0xff]
    %v107 = vld [vmem:[#allocation2 + $0x58] sm:$0xff]
    %v108 = vld [vmem:[#allocation2 + $0x60] sm:$0xff]
    %v109 = vld [vmem:[#allocation2 + $0x68] sm:$0xff]
    %v110 = vld [vmem:[#allocation2 + $0x70] sm:$0xff]
    %v111 = vld [vmem:[#allocation2 + $0x78] sm:$0xff]
    %v112 = vld [vmem:[#allocation2 + $0x80] sm:$0xff]
    %v113 = vld [vmem:[#allocation2 + $0x88] sm:$0xff]
    %v114 = vld [vmem:[#allocation2 + $0x90] sm:$0x11]
    %v115 = vld [vmem:[#allocation2 + $0x98] sm:$0x11]
    %v116 = vld [vmem:[%s5] sm:$0xf]
    %v118 = vlaneseq
    %v119 = vshrl.u32 %v118, 7
    %v120 = vsub.s32 0, %v119
    %v121 = vrot.slane %v116, %v120
    %v122 = vlaneseq
    %v123 = vshrl.u32 %v122, 7
    %v124 = vsub.s32 1, %v123
    %v125 = vrot.slane %v116, %v124
    %v126 = vlaneseq
    %v127 = vshrl.u32 %v126, 7
    %v128 = vsub.s32 2, %v127
    %v129 = vrot.slane %v116, %v128
    %v130 = vlaneseq
    %v131 = vshrl.u32 %v130, 7
    %v132 = vsub.s32 3, %v131
    %v133 = vrot.slane %v116, %v132
    %v158 = vunpack.c.l.b16 %v96
    %v159 = vunpack.c.h.b16 %v96
    %v160 = vunpack.c.l.b16 %v97
    %v161 = vunpack.c.h.b16 %v97
    %v162 = vunpack.c.l.b16 %v98
    %v163 = vunpack.c.h.b16 %v98
    %v164 = vunpack.c.l.b16 %v99
    %v165 = vunpack.c.h.b16 %v99
    %v166 = vunpack.c.l.b16 %v100
    %v167 = vunpack.c.h.b16 %v100
    %v168 = vunpack.c.l.b16 %v101
    %v169 = vunpack.c.h.b16 %v101
    %v170 = vunpack.c.l.b16 %v102
    %v171 = vunpack.c.h.b16 %v102
    %v172 = vunpack.c.l.b16 %v103
    %v173 = vunpack.c.h.b16 %v103
    %v174 = vunpack.c.l.b16 %v104
    %v175 = vunpack.c.h.b16 %v104
    %v176 = vunpack.c.l.b16 %v105
    %v177 = vunpack.c.h.b16 %v105
    %v178 = vunpack.c.l.b16 %v106
    %v179 = vunpack.c.h.b16 %v106
    %v180 = vunpack.c.l.b16 %v107
    %v181 = vunpack.c.h.b16 %v107
    %v182 = vunpack.c.l.b16 %v108
    %v183 = vunpack.c.h.b16 %v108
    %v184 = vunpack.c.l.b16 %v109
    %v185 = vunpack.c.h.b16 %v109
    %v186 = vunpack.c.l.b16 %v110
    %v187 = vunpack.c.h.b16 %v110
    %v188 = vunpack.c.l.b16 %v111
    %v189 = vunpack.c.h.b16 %v111
    %v190 = vunpack.c.l.b16 %v112
    %v191 = vunpack.c.h.b16 %v112
    %v192 = vunpack.c.l.b16 %v113
    %v193 = vunpack.c.h.b16 %v113
    %v194 = vunpack.c.l.b16 %v114
    %v195 = vunpack.c.h.b16 %v114
    %v196 = vunpack.c.l.b16 %v115
    %v197 = vunpack.c.h.b16 %v115
    %v198 = vpack.c.b16 %v162, %v158
    %v199 = vpack.c.b16 %v163, %v159
    %v200 = vpack.c.b16 %v164, %v160
    %v201 = vpack.c.b16 %v165, %v161
    %v202 = vpack.c.b16 %v170, %v166
    %v203 = vpack.c.b16 %v171, %v167
    %v204 = vpack.c.b16 %v172, %v168
    %v205 = vpack.c.b16 %v173, %v169
    %v206 = vpack.c.b16 %v178, %v174
    %v207 = vpack.c.b16 %v179, %v175
    %v208 = vpack.c.b16 %v180, %v176
    %v209 = vpack.c.b16 %v181, %v177
    %v210 = vpack.c.b16 %v186, %v182
    %v211 = vpack.c.b16 %v187, %v183
    %v212 = vpack.c.b16 %v188, %v184
    %v213 = vpack.c.b16 %v189, %v185
    %v214 = vpack.c.b16 %v194, %v190
    %v215 = vpack.c.b16 %v195, %v191
    %v216 = vpack.c.b16 %v196, %v192
    %v217 = vpack.c.b16 %v197, %v193
    %vm234 = vcmask 596992
    %v236 = vsel %vm234, %v95, 0
    %vm238 = vcmask 1043456
    %vm239 = vcmask 1044480
    %v240 = vsel %vm238, 4294967295, 65535
    %v241 = vsel %vm239, %v240, 0
    %v243 = vand.u32 %v214, %v241
    %v246 = vand.u32 %v215, %v241
    %v249 = vand.u32 %v216, %v241
    %v252 = vand.u32 %v217, %v241
    %254 = vmatprep.subr.bf16.mxu0 %v199
    %255 = vmatpush1.bf16.msra.mxu0 %v198
    %256 = vmatprep.subr.bf16.mxu0 %v203
    %257 = vmatpush1.bf16.msra.mxu0 %v202
    %258 = vmatprep.subr.bf16.mxu0 %v207
    %259 = vmatpush1.bf16.msra.mxu0 %v206
    %260 = vmatprep.subr.bf16.mxu0 %v211
    %261 = vmatpush1.bf16.msra.mxu0 %v210
    %262 = vmatprep.subr.bf16.mxu0 %v246
    %263 = vmatpush1.bf16.msra.mxu0 %v243
    %264 = vmatprep.subr.bf16.mxu0 0
    %265 = vmatpush1.bf16.msra.mxu0 0
    %266 = vmatprep.subr.bf16.mxu0 0
    %267 = vmatpush1.bf16.msra.mxu0 0
    %268 = vmatprep.subr.bf16.mxu0 0
    %269 = vmatpush1.bf16.msra.mxu0 0
    %270 = vmatprep.subr.bf16.mxu0 0
    %271 = vmatpush1.bf16.msra.mxu0 0
    %272 = vmatprep.subr.bf16.mxu0 0
    %273 = vmatpush1.bf16.msra.mxu0 0
    %274 = vmatprep.subr.bf16.mxu0 0
    %275 = vmatpush1.bf16.msra.mxu0 0
    %276 = vmatprep.subr.bf16.mxu0 0
    %277 = vmatpush1.bf16.msra.mxu0 0
    %278 = vmatprep.subr.bf16.mxu0 0
    %279 = vmatpush1.bf16.msra.mxu0 0
    %280 = vmatprep.subr.bf16.mxu0 0
    %281 = vmatpush1.bf16.msra.mxu0 0
    %282 = vmatprep.subr.bf16.mxu0 0
    %283 = vmatpush1.bf16.msra.mxu0 0
    %284 = vmatprep.subr.bf16.mxu0 0
    %285 = vmatpush1.bf16.msra.mxu0 0
    %286 = vmatprep.mubr.bf16.mxu0 0
    %287 = vmatmul.mubr.bf16.gmra.mrb[0].mxu0 %v236
    %v288 = vpop.f32.mrb[0].mxu0
    %v289 = vadd.f32 %v121, %v288
    %v290 = vpop.f32.mrb[0].mxu0
    %v291 = vadd.f32 %v125, %v290
    %v292 = vpop.f32.mrb[0].mxu0
    %v293 = vpop.f32.mrb[0].mxu0
    %294 = vdwg.mxu0
    %295 = vmatprep.subr.bf16.mxu0 %v201
    %296 = vmatpush1.bf16.msra.mxu0 %v200
    %297 = vmatprep.subr.bf16.mxu0 %v205
    %298 = vmatpush1.bf16.msra.mxu0 %v204
    %299 = vmatprep.subr.bf16.mxu0 %v209
    %300 = vmatpush1.bf16.msra.mxu0 %v208
    %301 = vmatprep.subr.bf16.mxu0 %v213
    %302 = vmatpush1.bf16.msra.mxu0 %v212
    %303 = vmatprep.subr.bf16.mxu0 %v252
    %304 = vmatpush1.bf16.msra.mxu0 %v249
    %305 = vmatprep.subr.bf16.mxu0 0
    %306 = vmatpush1.bf16.msra.mxu0 0
    %307 = vmatprep.subr.bf16.mxu0 0
    %308 = vmatpush1.bf16.msra.mxu0 0
    %309 = vmatprep.subr.bf16.mxu0 0
    %310 = vmatpush1.bf16.msra.mxu0 0
    %311 = vmatprep.subr.bf16.mxu0 0
    %312 = vmatpush1.bf16.msra.mxu0 0
    %313 = vmatprep.subr.bf16.mxu0 0
    %314 = vmatpush1.bf16.msra.mxu0 0
    %315 = vmatprep.subr.bf16.mxu0 0
    %316 = vmatpush1.bf16.msra.mxu0 0
    %317 = vmatprep.subr.bf16.mxu0 0
    %318 = vmatpush1.bf16.msra.mxu0 0
    %319 = vmatprep.subr.bf16.mxu0 0
    %320 = vmatpush1.bf16.msra.mxu0 0
    %321 = vmatprep.subr.bf16.mxu0 0
    %322 = vmatpush1.bf16.msra.mxu0 0
    %323 = vmatprep.subr.bf16.mxu0 0
    %324 = vmatpush1.bf16.msra.mxu0 0
    %325 = vmatprep.subr.bf16.mxu0 0
    %326 = vmatpush1.bf16.msra.mxu0 0
    %327 = vmatprep.mubr.bf16.mxu0 0
    %328 = vmatmul.mubr.bf16.gmra.mrb[0].mxu0 %v236
    %v329 = vpop.f32.mrb[0].mxu0
    %v330 = vadd.f32 %v129, %v329
    %v331 = vpop.f32.mrb[0].mxu0
    %v332 = vadd.f32 %v133, %v331
    %v333 = vpop.f32.mrb[0].mxu0
    %v334 = vpop.f32.mrb[0].mxu0
    %335 = vdwg.mxu0
    %v336 = vmax.f32 %v289, 0.0
    %v337 = vmax.f32 %v291, 0.0
    %v338 = vmax.f32 %v330, 0.0
    %v339 = vmax.f32 %v332, 0.0
    %v340 = vpack.c.bf16 %v336, %v336
    %v341 = vpack.c.bf16 %v337, %v337
    %v342 = vpack.c.bf16 %v338, %v338
    %v343 = vpack.c.bf16 %v339, %v339
    %v344 = vld [vmem:[#allocation4] sm:$0xff]
    %v345 = vld [vmem:[#allocation4 + $0x8] sm:$0xff]
    %v346 = vld [vmem:[#allocation4 + $0x10] sm:$0xff]
    %v347 = vld [vmem:[#allocation4 + $0x18] sm:$0xff]
    %v348 = vld [vmem:[#allocation4 + $0x20] sm:$0xff]
    %v349 = vld [vmem:[#allocation4 + $0x28] sm:$0xff]
    %v350 = vld [vmem:[#allocation4 + $0x30] sm:$0xff]
    %v351 = vld [vmem:[#allocation4 + $0x38] sm:$0xff]
    %v352 = vld [vmem:[#allocation4 + $0x40] sm:$0xff]
    %v353 = vld [vmem:[#allocation4 + $0x48] sm:$0xff]
    %v354 = vld [vmem:[#allocation4 + $0x50] sm:$0xff]
    %v355 = vld [vmem:[#allocation4 + $0x58] sm:$0xff]
    %v356 = vld [vmem:[#allocation4 + $0x60] sm:$0xff]
    %v357 = vld [vmem:[#allocation4 + $0x68] sm:$0xff]
    %v358 = vld [vmem:[#allocation4 + $0x70] sm:$0xff]
    %v359 = vld [vmem:[#allocation4 + $0x78] sm:$0xff]
    %v360 = vld [vmem:[#allocation4 + $0x80] sm:$0xff]
    %v361 = vld [vmem:[#allocation4 + $0x88] sm:$0xff]
    %v362 = vld [vmem:[#allocation4 + $0x90] sm:$0xff]
    %v363 = vld [vmem:[#allocation4 + $0x98] sm:$0xff]
    %v364 = vld [vmem:[#allocation4 + $0xa0] sm:$0xff]
    %v365 = vld [vmem:[#allocation4 + $0xa8] sm:$0xff]
    %v366 = vld [vmem:[#allocation4 + $0xb0] sm:$0xff]
    %v367 = vld [vmem:[#allocation4 + $0xb8] sm:$0xff]
    %v368 = vld [vmem:[#allocation4 + $0xc0] sm:$0xff]
    %v369 = vld [vmem:[#allocation4 + $0xc8] sm:$0xff]
    %v370 = vld [vmem:[#allocation4 + $0xd0] sm:$0xff]
    %v371 = vld [vmem:[#allocation4 + $0xd8] sm:$0xff]
    %v372 = vld [vmem:[#allocation4 + $0xe0] sm:$0xff]
    %v373 = vld [vmem:[#allocation4 + $0xe8] sm:$0xff]
    %v374 = vld [vmem:[#allocation4 + $0xf0] sm:$0xff]
    %v375 = vld [vmem:[#allocation4 + $0xf8] sm:$0xff]
    %v376 = vld [vmem:[#allocation4 + $0x100] sm:$0xff]
    %v377 = vld [vmem:[#allocation4 + $0x108] sm:$0xff]
    %v378 = vld [vmem:[#allocation4 + $0x110] sm:$0xff]
    %v379 = vld [vmem:[#allocation4 + $0x118] sm:$0xff]
    %v380 = vld [vmem:[#allocation4 + $0x120] sm:$0xff]
    %v381 = vld [vmem:[#allocation4 + $0x128] sm:$0xff]
    %v382 = vld [vmem:[#allocation4 + $0x130] sm:$0xff]
    %v383 = vld [vmem:[#allocation4 + $0x138] sm:$0xff]
    %v384 = vld [vmem:[#allocation4 + $0x140] sm:$0xff]
    %v385 = vld [vmem:[#allocation4 + $0x148] sm:$0xff]
    %v386 = vld [vmem:[#allocation4 + $0x150] sm:$0xff]
    %v387 = vld [vmem:[#allocation4 + $0x158] sm:$0xff]
    %v388 = vld [vmem:[#allocation4 + $0x160] sm:$0xff]
    %v389 = vld [vmem:[#allocation4 + $0x168] sm:$0xff]
    %v390 = vld [vmem:[#allocation4 + $0x170] sm:$0xff]
    %v391 = vld [vmem:[#allocation4 + $0x178] sm:$0xff]
    %v392 = vld [vmem:[#allocation4 + $0x180] sm:$0xff]
    %v393 = vld [vmem:[#allocation4 + $0x188] sm:$0xff]
    %v394 = vld [vmem:[#allocation4 + $0x190] sm:$0xff]
    %v395 = vld [vmem:[#allocation4 + $0x198] sm:$0xff]
    %v396 = vld [vmem:[#allocation4 + $0x1a0] sm:$0xff]
    %v397 = vld [vmem:[#allocation4 + $0x1a8] sm:$0xff]
    %v398 = vld [vmem:[#allocation4 + $0x1b0] sm:$0xff]
    %v399 = vld [vmem:[#allocation4 + $0x1b8] sm:$0xff]
    %v400 = vld [vmem:[#allocation4 + $0x1c0] sm:$0xff]
    %v401 = vld [vmem:[#allocation4 + $0x1c8] sm:$0xff]
    %v402 = vld [vmem:[#allocation4 + $0x1d0] sm:$0xff]
    %v403 = vld [vmem:[#allocation4 + $0x1d8] sm:$0xff]
    %v404 = vld [vmem:[#allocation4 + $0x1e0] sm:$0xff]
    %v405 = vld [vmem:[#allocation4 + $0x1e8] sm:$0xff]
    %v406 = vld [vmem:[#allocation4 + $0x1f0] sm:$0xff]
    %v407 = vld [vmem:[#allocation4 + $0x1f8] sm:$0xff]
    %v408 = vld [vmem:[%s5 + $0x4] sm:$0x3]
    %v410 = vlaneseq
    %v411 = vshrl.u32 %v410, 7
    %v412 = vsub.s32 0, %v411
    %v413 = vrot.slane %v408, %v412
    %v414 = vlaneseq
    %v415 = vshrl.u32 %v414, 7
    %v416 = vsub.s32 1, %v415
    %v417 = vrot.slane %v408, %v416
    %v484 = vunpack.c.l.b16 %v344
    %v485 = vunpack.c.h.b16 %v344
    %v486 = vunpack.c.l.b16 %v345
    %v487 = vunpack.c.h.b16 %v345
    %v488 = vunpack.c.l.b16 %v346
    %v489 = vunpack.c.h.b16 %v346
    %v490 = vunpack.c.l.b16 %v347
    %v491 = vunpack.c.h.b16 %v347
    %v492 = vunpack.c.l.b16 %v348
    %v493 = vunpack.c.h.b16 %v348
    %v494 = vunpack.c.l.b16 %v349
    %v495 = vunpack.c.h.b16 %v349
    %v496 = vunpack.c.l.b16 %v350
    %v497 = vunpack.c.h.b16 %v350
    %v498 = vunpack.c.l.b16 %v351
    %v499 = vunpack.c.h.b16 %v351
    %v500 = vunpack.c.l.b16 %v352
    %v501 = vunpack.c.h.b16 %v352
    %v502 = vunpack.c.l.b16 %v353
    %v503 = vunpack.c.h.b16 %v353
    %v504 = vunpack.c.l.b16 %v354
    %v505 = vunpack.c.h.b16 %v354
    %v506 = vunpack.c.l.b16 %v355
    %v507 = vunpack.c.h.b16 %v355
    %v508 = vunpack.c.l.b16 %v356
    %v509 = vunpack.c.h.b16 %v356
    %v510 = vunpack.c.l.b16 %v357
    %v511 = vunpack.c.h.b16 %v357
    %v512 = vunpack.c.l.b16 %v358
    %v513 = vunpack.c.h.b16 %v358
    %v514 = vunpack.c.l.b16 %v359
    %v515 = vunpack.c.h.b16 %v359
    %v516 = vunpack.c.l.b16 %v360
    %v517 = vunpack.c.h.b16 %v360
    %v518 = vunpack.c.l.b16 %v361
    %v519 = vunpack.c.h.b16 %v361
    %v520 = vunpack.c.l.b16 %v362
    %v521 = vunpack.c.h.b16 %v362
    %v522 = vunpack.c.l.b16 %v363
    %v523 = vunpack.c.h.b16 %v363
    %v524 = vunpack.c.l.b16 %v364
    %v525 = vunpack.c.h.b16 %v364
    %v526 = vunpack.c.l.b16 %v365
    %v527 = vunpack.c.h.b16 %v365
    %v528 = vunpack.c.l.b16 %v366
    %v529 = vunpack.c.h.b16 %v366
    %v530 = vunpack.c.l.b16 %v367
    %v531 = vunpack.c.h.b16 %v367
    %v532 = vunpack.c.l.b16 %v368
    %v533 = vunpack.c.h.b16 %v368
    %v534 = vunpack.c.l.b16 %v369
    %v535 = vunpack.c.h.b16 %v369
    %v536 = vunpack.c.l.b16 %v370
    %v537 = vunpack.c.h.b16 %v370
    %v538 = vunpack.c.l.b16 %v371
    %v539 = vunpack.c.h.b16 %v371
    %v540 = vunpack.c.l.b16 %v372
    %v541 = vunpack.c.h.b16 %v372
    %v542 = vunpack.c.l.b16 %v373
    %v543 = vunpack.c.h.b16 %v373
    %v544 = vunpack.c.l.b16 %v374
    %v545 = vunpack.c.h.b16 %v374
    %v546 = vunpack.c.l.b16 %v375
    %v547 = vunpack.c.h.b16 %v375
    %v548 = vunpack.c.l.b16 %v376
    %v549 = vunpack.c.h.b16 %v376
    %v550 = vunpack.c.l.b16 %v377
    %v551 = vunpack.c.h.b16 %v377
    %v552 = vunpack.c.l.b16 %v378
    %v553 = vunpack.c.h.b16 %v378
    %v554 = vunpack.c.l.b16 %v379
    %v555 = vunpack.c.h.b16 %v379
    %v556 = vunpack.c.l.b16 %v380
    %v557 = vunpack.c.h.b16 %v380
    %v558 = vunpack.c.l.b16 %v381
    %v559 = vunpack.c.h.b16 %v381
    %v560 = vunpack.c.l.b16 %v382
    %v561 = vunpack.c.h.b16 %v382
    %v562 = vunpack.c.l.b16 %v383
    %v563 = vunpack.c.h.b16 %v383
    %v564 = vunpack.c.l.b16 %v384
    %v565 = vunpack.c.h.b16 %v384
    %v566 = vunpack.c.l.b16 %v385
    %v567 = vunpack.c.h.b16 %v385
    %v568 = vunpack.c.l.b16 %v386
    %v569 = vunpack.c.h.b16 %v386
    %v570 = vunpack.c.l.b16 %v387
    %v571 = vunpack.c.h.b16 %v387
    %v572 = vunpack.c.l.b16 %v388
    %v573 = vunpack.c.h.b16 %v388
    %v574 = vunpack.c.l.b16 %v389
    %v575 = vunpack.c.h.b16 %v389
    %v576 = vunpack.c.l.b16 %v390
    %v577 = vunpack.c.h.b16 %v390
    %v578 = vunpack.c.l.b16 %v391
    %v579 = vunpack.c.h.b16 %v391
    %v580 = vunpack.c.l.b16 %v392
    %v581 = vunpack.c.h.b16 %v392
    %v582 = vunpack.c.l.b16 %v393
    %v583 = vunpack.c.h.b16 %v393
    %v584 = vunpack.c.l.b16 %v394
    %v585 = vunpack.c.h.b16 %v394
    %v586 = vunpack.c.l.b16 %v395
    %v587 = vunpack.c.h.b16 %v395
    %v588 = vunpack.c.l.b16 %v396
    %v589 = vunpack.c.h.b16 %v396
    %v590 = vunpack.c.l.b16 %v397
    %v591 = vunpack.c.h.b16 %v397
    %v592 = vunpack.c.l.b16 %v398
    %v593 = vunpack.c.h.b16 %v398
    %v594 = vunpack.c.l.b16 %v399
    %v595 = vunpack.c.h.b16 %v399
    %v596 = vunpack.c.l.b16 %v400
    %v597 = vunpack.c.h.b16 %v400
    %v598 = vunpack.c.l.b16 %v401
    %v599 = vunpack.c.h.b16 %v401
    %v600 = vunpack.c.l.b16 %v402
    %v601 = vunpack.c.h.b16 %v402
    %v602 = vunpack.c.l.b16 %v403
    %v603 = vunpack.c.h.b16 %v403
    %v604 = vunpack.c.l.b16 %v404
    %v605 = vunpack.c.h.b16 %v404
    %v606 = vunpack.c.l.b16 %v405
    %v607 = vunpack.c.h.b16 %v405
    %v608 = vunpack.c.l.b16 %v406
    %v609 = vunpack.c.h.b16 %v406
    %v610 = vunpack.c.l.b16 %v407
    %v611 = vunpack.c.h.b16 %v407
    %v612 = vpack.c.b16 %v486, %v484
    %v613 = vpack.c.b16 %v487, %v485
    %v614 = vpack.c.b16 %v490, %v488
    %v615 = vpack.c.b16 %v491, %v489
    %v616 = vpack.c.b16 %v494, %v492
    %v617 = vpack.c.b16 %v495, %v493
    %v618 = vpack.c.b16 %v498, %v496
    %v619 = vpack.c.b16 %v499, %v497
    %v620 = vpack.c.b16 %v502, %v500
    %v621 = vpack.c.b16 %v503, %v501
    %v622 = vpack.c.b16 %v506, %v504
    %v623 = vpack.c.b16 %v507, %v505
    %v624 = vpack.c.b16 %v510, %v508
    %v625 = vpack.c.b16 %v511, %v509
    %v626 = vpack.c.b16 %v514, %v512
    %v627 = vpack.c.b16 %v515, %v513
    %v628 = vpack.c.b16 %v518, %v516
    %v629 = vpack.c.b16 %v519, %v517
    %v630 = vpack.c.b16 %v522, %v520
    %v631 = vpack.c.b16 %v523, %v521
    %v632 = vpack.c.b16 %v526, %v524
    %v633 = vpack.c.b16 %v527, %v525
    %v634 = vpack.c.b16 %v530, %v528
    %v635 = vpack.c.b16 %v531, %v529
    %v636 = vpack.c.b16 %v534, %v532
    %v637 = vpack.c.b16 %v535, %v533
    %v638 = vpack.c.b16 %v538, %v536
    %v639 = vpack.c.b16 %v539, %v537
    %v640 = vpack.c.b16 %v542, %v540
    %v641 = vpack.c.b16 %v543, %v541
    %v642 = vpack.c.b16 %v546, %v544
    %v643 = vpack.c.b16 %v547, %v545
    %v644 = vpack.c.b16 %v550, %v548
    %v645 = vpack.c.b16 %v551, %v549
    %v646 = vpack.c.b16 %v554, %v552
    %v647 = vpack.c.b16 %v555, %v553
    %v648 = vpack.c.b16 %v558, %v556
    %v649 = vpack.c.b16 %v559, %v557
    %v650 = vpack.c.b16 %v562, %v560
    %v651 = vpack.c.b16 %v563, %v561
    %v652 = vpack.c.b16 %v566, %v564
    %v653 = vpack.c.b16 %v567, %v565
    %v654 = vpack.c.b16 %v570, %v568
    %v655 = vpack.c.b16 %v571, %v569
    %v656 = vpack.c.b16 %v574, %v572
    %v657 = vpack.c.b16 %v575, %v573
    %v658 = vpack.c.b16 %v578, %v576
    %v659 = vpack.c.b16 %v579, %v577
    %v660 = vpack.c.b16 %v582, %v580
    %v661 = vpack.c.b16 %v583, %v581
    %v662 = vpack.c.b16 %v586, %v584
    %v663 = vpack.c.b16 %v587, %v585
    %v664 = vpack.c.b16 %v590, %v588
    %v665 = vpack.c.b16 %v591, %v589
    %v666 = vpack.c.b16 %v594, %v592
    %v667 = vpack.c.b16 %v595, %v593
    %v668 = vpack.c.b16 %v598, %v596
    %v669 = vpack.c.b16 %v599, %v597
    %v670 = vpack.c.b16 %v602, %v600
    %v671 = vpack.c.b16 %v603, %v601
    %v672 = vpack.c.b16 %v606, %v604
    %v673 = vpack.c.b16 %v607, %v605
    %v674 = vpack.c.b16 %v610, %v608
    %v675 = vpack.c.b16 %v611, %v609
    %740 = vmatprep.subr.bf16.mxu0 %v613
    %741 = vmatpush1.bf16.msra.mxu0 %v612
    %742 = vmatprep.subr.bf16.mxu0 %v615
    %743 = vmatpush1.bf16.msra.mxu0 %v614
    %744 = vmatprep.subr.bf16.mxu0 %v617
    %745 = vmatpush1.bf16.msra.mxu0 %v616
    %746 = vmatprep.subr.bf16.mxu0 %v619
    %747 = vmatpush1.bf16.msra.mxu0 %v618
    %748 = vmatprep.subr.bf16.mxu0 %v621
    %749 = vmatpush1.bf16.msra.mxu0 %v620
    %750 = vmatprep.subr.bf16.mxu0 %v623
    %751 = vmatpush1.bf16.msra.mxu0 %v622
    %752 = vmatprep.subr.bf16.mxu0 %v625
    %753 = vmatpush1.bf16.msra.mxu0 %v624
    %754 = vmatprep.subr.bf16.mxu0 %v627
    %755 = vmatpush1.bf16.msra.mxu0 %v626
    %756 = vmatprep.subr.bf16.mxu0 %v629
    %757 = vmatpush1.bf16.msra.mxu0 %v628
    %758 = vmatprep.subr.bf16.mxu0 %v631
    %759 = vmatpush1.bf16.msra.mxu0 %v630
    %760 = vmatprep.subr.bf16.mxu0 %v633
    %761 = vmatpush1.bf16.msra.mxu0 %v632
    %762 = vmatprep.subr.bf16.mxu0 %v635
    %763 = vmatpush1.bf16.msra.mxu0 %v634
    %764 = vmatprep.subr.bf16.mxu0 %v637
    %765 = vmatpush1.bf16.msra.mxu0 %v636
    %766 = vmatprep.subr.bf16.mxu0 %v639
    %767 = vmatpush1.bf16.msra.mxu0 %v638
    %768 = vmatprep.subr.bf16.mxu0 %v641
    %769 = vmatpush1.bf16.msra.mxu0 %v640
    %770 = vmatprep.subr.bf16.mxu0 %v643
    %771 = vmatpush1.bf16.msra.mxu0 %v642
    %772 = vmatprep.mubr.bf16.mxu0 %v341
    %773 = vmatmul.mubr.bf16.gmra.mrb[0].mxu0 %v340
    %v774 = vpop.f32.mrb[0].mxu0
    %v775 = vadd.f32 %v413, %v774
    %v776 = vpop.f32.mrb[0].mxu0
    %v777 = vadd.f32 %v417, %v776
    %v778 = vpop.f32.mrb[0].mxu0
    %v779 = vpop.f32.mrb[0].mxu0
    %780 = vdwg.mxu0
    %781 = vmatprep.subr.bf16.mxu0 %v645
    %782 = vmatpush1.bf16.msra.mxu0 %v644
    %783 = vmatprep.subr.bf16.mxu0 %v647
    %784 = vmatpush1.bf16.msra.mxu0 %v646
    %785 = vmatprep.subr.bf16.mxu0 %v649
    %786 = vmatpush1.bf16.msra.mxu0 %v648
    %787 = vmatprep.subr.bf16.mxu0 %v651
    %788 = vmatpush1.bf16.msra.mxu0 %v650
    %789 = vmatprep.subr.bf16.mxu0 %v653
    %790 = vmatpush1.bf16.msra.mxu0 %v652
    %791 = vmatprep.subr.bf16.mxu0 %v655
    %792 = vmatpush1.bf16.msra.mxu0 %v654
    %793 = vmatprep.subr.bf16.mxu0 %v657
    %794 = vmatpush1.bf16.msra.mxu0 %v656
    %795 = vmatprep.subr.bf16.mxu0 %v659
    %796 = vmatpush1.bf16.msra.mxu0 %v658
    %797 = vmatprep.subr.bf16.mxu0 %v661
    %798 = vmatpush1.bf16.msra.mxu0 %v660
    %799 = vmatprep.subr.bf16.mxu0 %v663
    %800 = vmatpush1.bf16.msra.mxu0 %v662
    %801 = vmatprep.subr.bf16.mxu0 %v665
    %802 = vmatpush1.bf16.msra.mxu0 %v664
    %803 = vmatprep.subr.bf16.mxu0 %v667
    %804 = vmatpush1.bf16.msra.mxu0 %v666
    %805 = vmatprep.subr.bf16.mxu0 %v669
    %806 = vmatpush1.bf16.msra.mxu0 %v668
    %807 = vmatprep.subr.bf16.mxu0 %v671
    %808 = vmatpush1.bf16.msra.mxu0 %v670
    %809 = vmatprep.subr.bf16.mxu0 %v673
    %810 = vmatpush1.bf16.msra.mxu0 %v672
    %811 = vmatprep.subr.bf16.mxu0 %v675
    %812 = vmatpush1.bf16.msra.mxu0 %v674
    %813 = vmatprep.mubr.bf16.mxu0 %v343
    %814 = vmatmul.mubr.bf16.gmra.mrb[0].mxu0 %v342
    %v815 = vpop.f32.mrb[0].mxu0
    %v816 = vadd.f32 %v775, %v815
    %v817 = vpop.f32.mrb[0].mxu0
    %v818 = vadd.f32 %v777, %v817
    %v819 = vpop.f32.mrb[0].mxu0
    %v820 = vpop.f32.mrb[0].mxu0
    %821 = vdwg.mxu0
    %v822 = vmax.f32 %v816, 0.0
    %v823 = vmax.f32 %v818, 0.0
    %v824 = vpack.c.bf16 %v822, %v822
    %v825 = vpack.c.bf16 %v823, %v823
    %v826 = vld [vmem:[%s4] sm:$0xf]
    %v827 = vld [vmem:[%s4 + $0x4] sm:$0xf]
    %v828 = vld [vmem:[%s4 + $0x8] sm:$0xf]
    %v829 = vld [vmem:[%s4 + $0xc] sm:$0xf]
    %v830 = vld [vmem:[%s4 + $0x10] sm:$0xf]
    %v831 = vld [vmem:[%s4 + $0x14] sm:$0xf]
    %v832 = vld [vmem:[%s4 + $0x18] sm:$0xf]
    %v833 = vld [vmem:[%s4 + $0x1c] sm:$0xf]
    %v834 = vld [vmem:[%s4 + $0x20] sm:$0xf]
    %v835 = vld [vmem:[%s4 + $0x24] sm:$0xf]
    %v836 = vld [vmem:[%s4 + $0x28] sm:$0xf]
    %v837 = vld [vmem:[%s4 + $0x2c] sm:$0xf]
    %v838 = vld [vmem:[%s4 + $0x30] sm:$0xf]
    %v839 = vld [vmem:[%s4 + $0x34] sm:$0xf]
    %v840 = vld [vmem:[%s4 + $0x38] sm:$0xf]
    %v841 = vld [vmem:[%s4 + $0x3c] sm:$0xf]
    %v842 = vld [vmem:[%s4 + $0x40] sm:$0xf]
    %v843 = vld [vmem:[%s4 + $0x44] sm:$0xf]
    %v844 = vld [vmem:[%s4 + $0x48] sm:$0xf]
    %v845 = vld [vmem:[%s4 + $0x4c] sm:$0xf]
    %v846 = vld [vmem:[%s4 + $0x50] sm:$0xf]
    %v847 = vld [vmem:[%s4 + $0x54] sm:$0xf]
    %v848 = vld [vmem:[%s4 + $0x58] sm:$0xf]
    %v849 = vld [vmem:[%s4 + $0x5c] sm:$0xf]
    %v850 = vld [vmem:[%s4 + $0x60] sm:$0xf]
    %v851 = vld [vmem:[%s4 + $0x64] sm:$0xf]
    %v852 = vld [vmem:[%s4 + $0x68] sm:$0xf]
    %v853 = vld [vmem:[%s4 + $0x6c] sm:$0xf]
    %v854 = vld [vmem:[%s4 + $0x70] sm:$0xf]
    %v855 = vld [vmem:[%s4 + $0x74] sm:$0xf]
    %v856 = vld [vmem:[%s4 + $0x78] sm:$0xf]
    %v857 = vld [vmem:[%s4 + $0x7c] sm:$0xf]
    %v858 = vld [vmem:[%s5 + $0x6] sm:$0x1]
    %v860 = vlaneseq
    %v861 = vshrl.u32 %v860, 7
    %v862 = vsub.s32 0, %v861
    %v863 = vrot.slane %v858, %v862
    %v897 = vunpack.c.l.b16 %v826
    %v898 = vunpack.c.l.b16 %v827
    %v899 = vunpack.c.l.b16 %v828
    %v900 = vunpack.c.l.b16 %v829
    %v901 = vunpack.c.l.b16 %v830
    %v902 = vunpack.c.l.b16 %v831
    %v903 = vunpack.c.l.b16 %v832
    %v904 = vunpack.c.l.b16 %v833
    %v905 = vunpack.c.l.b16 %v834
    %v906 = vunpack.c.l.b16 %v835
    %v907 = vunpack.c.l.b16 %v836
    %v908 = vunpack.c.l.b16 %v837
    %v909 = vunpack.c.l.b16 %v838
    %v910 = vunpack.c.l.b16 %v839
    %v911 = vunpack.c.l.b16 %v840
    %v912 = vunpack.c.l.b16 %v841
    %v913 = vunpack.c.l.b16 %v842
    %v914 = vunpack.c.l.b16 %v843
    %v915 = vunpack.c.l.b16 %v844
    %v916 = vunpack.c.l.b16 %v845
    %v917 = vunpack.c.l.b16 %v846
    %v918 = vunpack.c.l.b16 %v847
    %v919 = vunpack.c.l.b16 %v848
    %v920 = vunpack.c.l.b16 %v849
    %v921 = vunpack.c.l.b16 %v850
    %v922 = vunpack.c.l.b16 %v851
    %v923 = vunpack.c.l.b16 %v852
    %v924 = vunpack.c.l.b16 %v853
    %v925 = vunpack.c.l.b16 %v854
    %v926 = vunpack.c.l.b16 %v855
    %v927 = vunpack.c.l.b16 %v856
    %v928 = vunpack.c.l.b16 %v857
    %v929 = vpack.c.b16 %v898, %v897
    %v930 = vpack.c.b16 %v900, %v899
    %v931 = vpack.c.b16 %v902, %v901
    %v932 = vpack.c.b16 %v904, %v903
    %v933 = vpack.c.b16 %v906, %v905
    %v934 = vpack.c.b16 %v908, %v907
    %v935 = vpack.c.b16 %v910, %v909
    %v936 = vpack.c.b16 %v912, %v911
    %v937 = vpack.c.b16 %v914, %v913
    %v938 = vpack.c.b16 %v916, %v915
    %v939 = vpack.c.b16 %v918, %v917
    %v940 = vpack.c.b16 %v920, %v919
    %v941 = vpack.c.b16 %v922, %v921
    %v942 = vpack.c.b16 %v924, %v923
    %v943 = vpack.c.b16 %v926, %v925
    %v944 = vpack.c.b16 %v928, %v927
    %961 = vmatprep.subr.bf16.mxu0 0
    %962 = vmatpush1.bf16.msra.mxu0 %v929
    %963 = vmatprep.subr.bf16.mxu0 0
    %964 = vmatpush1.bf16.msra.mxu0 %v930
    %965 = vmatprep.subr.bf16.mxu0 0
    %966 = vmatpush1.bf16.msra.mxu0 %v931
    %967 = vmatprep.subr.bf16.mxu0 0
    %968 = vmatpush1.bf16.msra.mxu0 %v932
    %969 = vmatprep.subr.bf16.mxu0 0
    %970 = vmatpush1.bf16.msra.mxu0 %v933
    %971 = vmatprep.subr.bf16.mxu0 0
    %972 = vmatpush1.bf16.msra.mxu0 %v934
    %973 = vmatprep.subr.bf16.mxu0 0
    %974 = vmatpush1.bf16.msra.mxu0 %v935
    %975 = vmatprep.subr.bf16.mxu0 0
    %976 = vmatpush1.bf16.msra.mxu0 %v936
    %977 = vmatprep.subr.bf16.mxu0 0
    %978 = vmatpush1.bf16.msra.mxu0 %v937
    %979 = vmatprep.subr.bf16.mxu0 0
    %980 = vmatpush1.bf16.msra.mxu0 %v938
    %981 = vmatprep.subr.bf16.mxu0 0
    %982 = vmatpush1.bf16.msra.mxu0 %v939
    %983 = vmatprep.subr.bf16.mxu0 0
    %984 = vmatpush1.bf16.msra.mxu0 %v940
    %985 = vmatprep.subr.bf16.mxu0 0
    %986 = vmatpush1.bf16.msra.mxu0 %v941
    %987 = vmatprep.subr.bf16.mxu0 0
    %988 = vmatpush1.bf16.msra.mxu0 %v942
    %989 = vmatprep.subr.bf16.mxu0 0
    %990 = vmatpush1.bf16.msra.mxu0 %v943
    %991 = vmatprep.subr.bf16.mxu0 0
    %992 = vmatpush1.bf16.msra.mxu0 %v944
    %993 = vmatprep.mubr.bf16.mxu0 %v825
    %994 = vmatmul.mubr.bf16.gmra.mrb[0].mxu0 %v824
    %v995 = vpop.f32.mrb[0].mxu0
    %v996 = vadd.f32 %v863, %v995
    %v997 = vpop.f32.mrb[0].mxu0
    %v998 = vpop.f32.mrb[0].mxu0
    %v999 = vpop.f32.mrb[0].mxu0
    %1000 = vdwg.mxu0
    %v1001 = vmax.f32 %v996, 0.0
    %v1002 = vld [vmem:[%s1] sm:$0xff]
    %1004 = vset.pattern.permute.xlu0 0
    %1005 = vperm.xlu0 %1004, %v1002
    %v1006 = vpop.permute.xlu0 %1005
    %v1008 = vmul.f32 %v1002, %v1006
    %v1009 = vld [vmem:[%s6] sm:$0xff]
    %v1010 = vld [vmem:[%s6 + $0x8] sm:$0xff]
    %v1011 = vld [vmem:[%s6 + $0x10] sm:$0xff]
    %v1012 = vld [vmem:[%s6 + $0x18] sm:$0xff]
    %v1013 = vld [vmem:[%s6 + $0x20] sm:$0xff]
    %v1014 = vld [vmem:[%s6 + $0x28] sm:$0xff]
    %v1015 = vld [vmem:[%s6 + $0x30] sm:$0xff]
    %v1016 = vld [vmem:[%s6 + $0x38] sm:$0xff]
    %v1017 = vld [vmem:[%s6 + $0x40] sm:$0xff]
    %v1018 = vld [vmem:[%s6 + $0x48] sm:$0xff]
    %v1019 = vld [vmem:[%s6 + $0x50] sm:$0xff]
    %v1020 = vld [vmem:[%s6 + $0x58] sm:$0xff]
    %v1021 = vld [vmem:[%s6 + $0x60] sm:$0xff]
    %v1022 = vld [vmem:[%s6 + $0x68] sm:$0xff]
    %v1023 = vld [vmem:[%s6 + $0x70] sm:$0xff]
    %v1024 = vld [vmem:[%s6 + $0x78] sm:$0xff]
    %v1025 = vld [vmem:[%s6 + $0x80] sm:$0xff]
    %v1026 = vld [vmem:[%s6 + $0x88] sm:$0xff]
    %v1027 = vld [vmem:[%s6 + $0x90] sm:$0xff]
    %v1028 = vld [vmem:[%s6 + $0x98] sm:$0xff]
    %v1029 = vld [vmem:[%s6 + $0xa0] sm:$0xff]
    %v1030 = vld [vmem:[%s6 + $0xa8] sm:$0xff]
    %v1031 = vld [vmem:[%s6 + $0xb0] sm:$0xff]
    %v1032 = vld [vmem:[%s6 + $0xb8] sm:$0xff]
    %v1033 = vld [vmem:[%s6 + $0xc0] sm:$0xff]
    %v1034 = vld [vmem:[%s6 + $0xc8] sm:$0xff]
    %v1035 = vld [vmem:[%s6 + $0xd0] sm:$0xff]
    %v1036 = vld [vmem:[%s6 + $0xd8] sm:$0x1]
    %v1037 = vld [vmem:[%s6 + $0xe0] sm:$0x1]
    %v1038 = vld [vmem:[%s6 + $0xe8] sm:$0x1]
    %v1039 = vld [vmem:[%s8] sm:$0x7]
    %v1041 = vlaneseq
    %v1042 = vshrl.u32 %v1041, 7
    %v1043 = vsub.s32 0, %v1042
    %v1044 = vrot.slane %v1039, %v1043
    %v1045 = vlaneseq
    %v1046 = vshrl.u32 %v1045, 7
    %v1047 = vsub.s32 1, %v1046
    %v1048 = vrot.slane %v1039, %v1047
    %v1049 = vlaneseq
    %v1050 = vshrl.u32 %v1049, 7
    %v1051 = vsub.s32 2, %v1050
    %v1052 = vrot.slane %v1039, %v1051
    %v1057 = vsel %vm234, %v94, 0
    %vm1059 = vcmask 1040384
    %v1061 = vsel %vm1059, %v1036, 0
    %v1064 = vsel %vm1059, %v1037, 0
    %v1067 = vsel %vm1059, %v1038, 0
    %1069 = vmatprep.subr.mxu0 %v1010
    %1070 = vmatpush1.msra.mxu0 %v1009
    %1071 = vmatprep.subr.mxu0 %v1013
    %1072 = vmatpush1.msra.mxu0 %v1012
    %1073 = vmatprep.subr.mxu0 %v1016
    %1074 = vmatpush1.msra.mxu0 %v1015
    %1075 = vmatprep.subr.mxu0 %v1019
    %1076 = vmatpush1.msra.mxu0 %v1018
    %1077 = vmatprep.subr.mxu0 %v1022
    %1078 = vmatpush1.msra.mxu0 %v1021
    %1079 = vmatprep.subr.mxu0 %v1025
    %1080 = vmatpush1.msra.mxu0 %v1024
    %1081 = vmatprep.subr.mxu0 %v1028
    %1082 = vmatpush1.msra.mxu0 %v1027
    %1083 = vmatprep.subr.mxu0 %v1031
    %1084 = vmatpush1.msra.mxu0 %v1030
    %1085 = vmatprep.subr.mxu0 %v1034
    %1086 = vmatpush1.msra.mxu0 %v1033
    %1087 = vmatprep.subr.mxu0 %v1064
    %1088 = vmatpush1.msra.mxu0 %v1061
    %1089 = vmatprep.subr.mxu0 0.0
    %1090 = vmatpush1.msra.mxu0 0.0
    %1091 = vmatprep.subr.mxu0 0.0
    %1092 = vmatpush1.msra.mxu0 0.0
    %1093 = vmatprep.subr.mxu0 0.0
    %1094 = vmatpush1.msra.mxu0 0.0
    %1095 = vmatprep.subr.mxu0 0.0
    %1096 = vmatpush1.msra.mxu0 0.0
    %1097 = vmatprep.subr.mxu0 0.0
    %1098 = vmatpush1.msra.mxu0 0.0
    %1099 = vmatprep.subr.mxu0 0.0
    %1100 = vmatpush1.msra.mxu0 0.0
    %1101 = vmatprep.subr.mxu0 0.0
    %1102 = vmatpush1.msra.mxu0 0.0
    %1103 = vmatprep.subr.mxu0 0.0
    %1104 = vmatpush1.msra.mxu0 0.0
    %1105 = vmatprep.subr.mxu0 0.0
    %1106 = vmatpush1.msra.mxu0 0.0
    %1107 = vmatprep.subr.mxu0 0.0
    %1108 = vmatpush1.msra.mxu0 0.0
    %1109 = vmatprep.subr.mxu0 0.0
    %1110 = vmatpush1.msra.mxu0 0.0
    %1111 = vmatprep.subr.mxu0 0.0
    %1112 = vmatpush1.msra.mxu0 0.0
    %1113 = vmatprep.subr.mxu0 0.0
    %1114 = vmatpush1.msra.mxu0 0.0
    %1115 = vmatprep.subr.mxu0 0.0
    %1116 = vmatpush1.msra.mxu0 0.0
    %1117 = vmatprep.subr.mxu0 0.0
    %1118 = vmatpush1.msra.mxu0 0.0
    %1119 = vmatprep.subr.mxu0 0.0
    %1120 = vmatpush1.msra.mxu0 0.0
    %1121 = vmatprep.subr.mxu0 0.0
    %1122 = vmatpush1.msra.mxu0 0.0
    %1123 = vmatprep.subr.mxu0 0.0
    %1124 = vmatpush1.msra.mxu0 0.0
    %1125 = vmatprep.subr.mxu0 0.0
    %1126 = vmatpush1.msra.mxu0 0.0
    %1127 = vmatprep.subr.mxu0 0.0
    %1128 = vmatpush1.msra.mxu0 0.0
    %1129 = vmatprep.subr.mxu0 0.0
    %1130 = vmatpush1.msra.mxu0 0.0
    %1131 = vmatprep.subr.mxu0 0.0
    %1132 = vmatpush1.msra.mxu0 0.0
    %1133 = vmatprep.mubr.f32.mxu0 0.0
    %1134 = vmatmul.mubr.f32.gmra.mrb[0].mxu0 %v1057
    %v1135 = vpop.f32.mrb[0].mxu0
    %v1136 = vadd.f32 %v1044, %v1135
    %v1137 = vpop.f32.mrb[0].mxu0
    %v1138 = vadd.f32 %v1048, %v1137
    %1139 = vdwg.mxu0
    %1140 = vmatprep.subr.mxu0 0.0
    %1141 = vmatpush1.msra.mxu0 %v1011
    %1142 = vmatprep.subr.mxu0 0.0
    %1143 = vmatpush1.msra.mxu0 %v1014
    %1144 = vmatprep.subr.mxu0 0.0
    %1145 = vmatpush1.msra.mxu0 %v1017
    %1146 = vmatprep.subr.mxu0 0.0
    %1147 = vmatpush1.msra.mxu0 %v1020
    %1148 = vmatprep.subr.mxu0 0.0
    %1149 = vmatpush1.msra.mxu0 %v1023
    %1150 = vmatprep.subr.mxu0 0.0
    %1151 = vmatpush1.msra.mxu0 %v1026
    %1152 = vmatprep.subr.mxu0 0.0
    %1153 = vmatpush1.msra.mxu0 %v1029
    %1154 = vmatprep.subr.mxu0 0.0
    %1155 = vmatpush1.msra.mxu0 %v1032
    %1156 = vmatprep.subr.mxu0 0.0
    %1157 = vmatpush1.msra.mxu0 %v1035
    %1158 = vmatprep.subr.mxu0 0.0
    %1159 = vmatpush1.msra.mxu0 %v1067
    %1160 = vmatprep.subr.mxu0 0.0
    %1161 = vmatpush1.msra.mxu0 0.0
    %1162 = vmatprep.subr.mxu0 0.0
    %1163 = vmatpush1.msra.mxu0 0.0
    %1164 = vmatprep.subr.mxu0 0.0
    %1165 = vmatpush1.msra.mxu0 0.0
    %1166 = vmatprep.subr.mxu0 0.0
    %1167 = vmatpush1.msra.mxu0 0.0
    %1168 = vmatprep.subr.mxu0 0.0
    %1169 = vmatpush1.msra.mxu0 0.0
    %1170 = vmatprep.subr.mxu0 0.0
    %1171 = vmatpush1.msra.mxu0 0.0
    %1172 = vmatprep.subr.mxu0 0.0
    %1173 = vmatpush1.msra.mxu0 0.0
    %1174 = vmatprep.subr.mxu0 0.0
    %1175 = vmatpush1.msra.mxu0 0.0
    %1176 = vmatprep.subr.mxu0 0.0
    %1177 = vmatpush1.msra.mxu0 0.0
    %1178 = vmatprep.subr.mxu0 0.0
    %1179 = vmatpush1.msra.mxu0 0.0
    %1180 = vmatprep.subr.mxu0 0.0
    %1181 = vmatpush1.msra.mxu0 0.0
    %1182 = vmatprep.subr.mxu0 0.0
    %1183 = vmatpush1.msra.mxu0 0.0
    %1184 = vmatprep.subr.mxu0 0.0
    %1185 = vmatpush1.msra.mxu0 0.0
    %1186 = vmatprep.subr.mxu0 0.0
    %1187 = vmatpush1.msra.mxu0 0.0
    %1188 = vmatprep.subr.mxu0 0.0
    %1189 = vmatpush1.msra.mxu0 0.0
    %1190 = vmatprep.subr.mxu0 0.0
    %1191 = vmatpush1.msra.mxu0 0.0
    %1192 = vmatprep.subr.mxu0 0.0
    %1193 = vmatpush1.msra.mxu0 0.0
    %1194 = vmatprep.subr.mxu0 0.0
    %1195 = vmatpush1.msra.mxu0 0.0
    %1196 = vmatprep.subr.mxu0 0.0
    %1197 = vmatpush1.msra.mxu0 0.0
    %1198 = vmatprep.subr.mxu0 0.0
    %1199 = vmatpush1.msra.mxu0 0.0
    %1200 = vmatprep.subr.mxu0 0.0
    %1201 = vmatpush1.msra.mxu0 0.0
    %1202 = vmatprep.subr.mxu0 0.0
    %1203 = vmatpush1.msra.mxu0 0.0
    %1204 = vmatprep.mubr.f32.mxu0 0.0
    %1205 = vmatmul.mubr.f32.gmra.mrb[0].mxu0 %v1057
    %v1206 = vpop.f32.mrb[0].mxu0
    %v1207 = vadd.f32 %v1052, %v1206
    %v1208 = vpop.f32.mrb[0].mxu0
    %1209 = vdwg.mxu0
    %v1210 = vld [vmem:[#allocation6] sm:$0xff]
    %v1211 = vld [vmem:[#allocation6 + $0x8] sm:$0xff]
    %v1212 = vld [vmem:[#allocation6 + $0x10] sm:$0xff]
    %v1213 = vld [vmem:[#allocation6 + $0x18] sm:$0xff]
    %v1214 = vld [vmem:[#allocation6 + $0x20] sm:$0xff]
    %v1215 = vld [vmem:[#allocation6 + $0x28] sm:$0xff]
    %v1216 = vld [vmem:[#allocation6 + $0x30] sm:$0xff]
    %v1217 = vld [vmem:[#allocation6 + $0x38] sm:$0xff]
    %v1218 = vld [vmem:[#allocation6 + $0x40] sm:$0xff]
    %v1219 = vld [vmem:[#allocation6 + $0x48] sm:$0xff]
    %v1220 = vld [vmem:[#allocation6 + $0x50] sm:$0xff]
    %v1221 = vld [vmem:[#allocation6 + $0x58] sm:$0xff]
    %v1222 = vld [vmem:[#allocation6 + $0x60] sm:$0xff]
    %v1223 = vld [vmem:[#allocation6 + $0x68] sm:$0xff]
    %v1224 = vld [vmem:[#allocation6 + $0x70] sm:$0xff]
    %v1225 = vld [vmem:[#allocation6 + $0x78] sm:$0xff]
    %v1226 = vld [vmem:[#allocation6 + $0x80] sm:$0xff]
    %v1227 = vld [vmem:[#allocation6 + $0x88] sm:$0xff]
    %v1228 = vld [vmem:[#allocation6 + $0x90] sm:$0xff]
    %v1229 = vld [vmem:[#allocation6 + $0x98] sm:$0xff]
    %v1230 = vld [vmem:[#allocation6 + $0xa0] sm:$0xff]
    %v1231 = vld [vmem:[#allocation6 + $0xa8] sm:$0xff]
    %v1232 = vld [vmem:[#allocation6 + $0xb0] sm:$0xff]
    %v1233 = vld [vmem:[#allocation6 + $0xb8] sm:$0xff]
    %v1234 = vld [vmem:[%s8 + $0x3] sm:$0x7]
    %v1236 = vlaneseq
    %v1237 = vshrl.u32 %v1236, 7
    %v1238 = vsub.s32 0, %v1237
    %v1239 = vrot.slane %v1234, %v1238
    %v1240 = vlaneseq
    %v1241 = vshrl.u32 %v1240, 7
    %v1242 = vsub.s32 1, %v1241
    %v1243 = vrot.slane %v1234, %v1242
    %v1244 = vlaneseq
    %v1245 = vshrl.u32 %v1244, 7
    %v1246 = vsub.s32 2, %v1245
    %v1247 = vrot.slane %v1234, %v1246
    %1252 = vrot.lane.b32.xlu0 %v1008, 64
    %v1253 = vpop.permute.xlu0 %1252
    %vm1254 = vcmask 523264
    %v1255 = vsel %vm1254, %v1253, 0
    %1257 = vmatprep.subr.mxu0 %v1211
    %1258 = vmatpush1.msra.mxu0 %v1210
    %1259 = vmatprep.subr.mxu0 %v1214
    %1260 = vmatpush1.msra.mxu0 %v1213
    %1261 = vmatprep.subr.mxu0 %v1217
    %1262 = vmatpush1.msra.mxu0 %v1216
    %1263 = vmatprep.subr.mxu0 %v1220
    %1264 = vmatpush1.msra.mxu0 %v1219
    %1265 = vmatprep.subr.mxu0 %v1223
    %1266 = vmatpush1.msra.mxu0 %v1222
    %1267 = vmatprep.subr.mxu0 %v1226
    %1268 = vmatpush1.msra.mxu0 %v1225
    %1269 = vmatprep.subr.mxu0 %v1229
    %1270 = vmatpush1.msra.mxu0 %v1228
    %1271 = vmatprep.subr.mxu0 %v1232
    %1272 = vmatpush1.msra.mxu0 %v1231
    %1273 = vmatprep.subr.mxu0 0.0
    %1274 = vmatpush1.msra.mxu0 0.0
    %1275 = vmatprep.subr.mxu0 0.0
    %1276 = vmatpush1.msra.mxu0 0.0
    %1277 = vmatprep.subr.mxu0 0.0
    %1278 = vmatpush1.msra.mxu0 0.0
    %1279 = vmatprep.subr.mxu0 0.0
    %1280 = vmatpush1.msra.mxu0 0.0
    %1281 = vmatprep.subr.mxu0 0.0
    %1282 = vmatpush1.msra.mxu0 0.0
    %1283 = vmatprep.subr.mxu0 0.0
    %1284 = vmatpush1.msra.mxu0 0.0
    %1285 = vmatprep.subr.mxu0 0.0
    %1286 = vmatpush1.msra.mxu0 0.0
    %1287 = vmatprep.subr.mxu0 0.0
    %1288 = vmatpush1.msra.mxu0 0.0
    %1289 = vmatprep.subr.mxu0 0.0
    %1290 = vmatpush1.msra.mxu0 0.0
    %1291 = vmatprep.subr.mxu0 0.0
    %1292 = vmatpush1.msra.mxu0 0.0
    %1293 = vmatprep.subr.mxu0 0.0
    %1294 = vmatpush1.msra.mxu0 0.0
    %1295 = vmatprep.subr.mxu0 0.0
    %1296 = vmatpush1.msra.mxu0 0.0
    %1297 = vmatprep.subr.mxu0 0.0
    %1298 = vmatpush1.msra.mxu0 0.0
    %1299 = vmatprep.subr.mxu0 0.0
    %1300 = vmatpush1.msra.mxu0 0.0
    %1301 = vmatprep.subr.mxu0 0.0
    %1302 = vmatpush1.msra.mxu0 0.0
    %1303 = vmatprep.subr.mxu0 0.0
    %1304 = vmatpush1.msra.mxu0 0.0
    %1305 = vmatprep.subr.mxu0 0.0
    %1306 = vmatpush1.msra.mxu0 0.0
    %1307 = vmatprep.subr.mxu0 0.0
    %1308 = vmatpush1.msra.mxu0 0.0
    %1309 = vmatprep.subr.mxu0 0.0
    %1310 = vmatpush1.msra.mxu0 0.0
    %1311 = vmatprep.subr.mxu0 0.0
    %1312 = vmatpush1.msra.mxu0 0.0
    %1313 = vmatprep.subr.mxu0 0.0
    %1314 = vmatpush1.msra.mxu0 0.0
    %1315 = vmatprep.subr.mxu0 0.0
    %1316 = vmatpush1.msra.mxu0 0.0
    %1317 = vmatprep.subr.mxu0 0.0
    %1318 = vmatpush1.msra.mxu0 0.0
    %1319 = vmatprep.subr.mxu0 0.0
    %1320 = vmatpush1.msra.mxu0 0.0
    %1321 = vmatprep.mubr.f32.mxu0 0.0
    %1322 = vmatmul.mubr.f32.gmra.mrb[0].mxu0 %v1255
    %v1323 = vpop.f32.mrb[0].mxu0
    %v1324 = vadd.f32 %v1239, %v1323
    %v1325 = vpop.f32.mrb[0].mxu0
    %v1326 = vadd.f32 %v1243, %v1325
    %1327 = vdwg.mxu0
    %1328 = vmatprep.subr.mxu0 0.0
    %1329 = vmatpush1.msra.mxu0 %v1212
    %1330 = vmatprep.subr.mxu0 0.0
    %1331 = vmatpush1.msra.mxu0 %v1215
    %1332 = vmatprep.subr.mxu0 0.0
    %1333 = vmatpush1.msra.mxu0 %v1218
    %1334 = vmatprep.subr.mxu0 0.0
    %1335 = vmatpush1.msra.mxu0 %v1221
    %1336 = vmatprep.subr.mxu0 0.0
    %1337 = vmatpush1.msra.mxu0 %v1224
    %1338 = vmatprep.subr.mxu0 0.0
    %1339 = vmatpush1.msra.mxu0 %v1227
    %1340 = vmatprep.subr.mxu0 0.0
    %1341 = vmatpush1.msra.mxu0 %v1230
    %1342 = vmatprep.subr.mxu0 0.0
    %1343 = vmatpush1.msra.mxu0 %v1233
    %1344 = vmatprep.subr.mxu0 0.0
    %1345 = vmatpush1.msra.mxu0 0.0
    %1346 = vmatprep.subr.mxu0 0.0
    %1347 = vmatpush1.msra.mxu0 0.0
    %1348 = vmatprep.subr.mxu0 0.0
    %1349 = vmatpush1.msra.mxu0 0.0
    %1350 = vmatprep.subr.mxu0 0.0
    %1351 = vmatpush1.msra.mxu0 0.0
    %1352 = vmatprep.subr.mxu0 0.0
    %1353 = vmatpush1.msra.mxu0 0.0
    %1354 = vmatprep.subr.mxu0 0.0
    %1355 = vmatpush1.msra.mxu0 0.0
    %1356 = vmatprep.subr.mxu0 0.0
    %1357 = vmatpush1.msra.mxu0 0.0
    %1358 = vmatprep.subr.mxu0 0.0
    %1359 = vmatpush1.msra.mxu0 0.0
    %1360 = vmatprep.subr.mxu0 0.0
    %1361 = vmatpush1.msra.mxu0 0.0
    %1362 = vmatprep.subr.mxu0 0.0
    %1363 = vmatpush1.msra.mxu0 0.0
    %1364 = vmatprep.subr.mxu0 0.0
    %1365 = vmatpush1.msra.mxu0 0.0
    %1366 = vmatprep.subr.mxu0 0.0
    %1367 = vmatpush1.msra.mxu0 0.0
    %1368 = vmatprep.subr.mxu0 0.0
    %1369 = vmatpush1.msra.mxu0 0.0
    %1370 = vmatprep.subr.mxu0 0.0
    %1371 = vmatpush1.msra.mxu0 0.0
    %1372 = vmatprep.subr.mxu0 0.0
    %1373 = vmatpush1.msra.mxu0 0.0
    %1374 = vmatprep.subr.mxu0 0.0
    %1375 = vmatpush1.msra.mxu0 0.0
    %1376 = vmatprep.subr.mxu0 0.0
    %1377 = vmatpush1.msra.mxu0 0.0
    %1378 = vmatprep.subr.mxu0 0.0
    %1379 = vmatpush1.msra.mxu0 0.0
    %1380 = vmatprep.subr.mxu0 0.0
    %1381 = vmatpush1.msra.mxu0 0.0
    %1382 = vmatprep.subr.mxu0 0.0
    %1383 = vmatpush1.msra.mxu0 0.0
    %1384 = vmatprep.subr.mxu0 0.0
    %1385 = vmatpush1.msra.mxu0 0.0
    %1386 = vmatprep.subr.mxu0 0.0
    %1387 = vmatpush1.msra.mxu0 0.0
    %1388 = vmatprep.subr.mxu0 0.0
    %1389 = vmatpush1.msra.mxu0 0.0
    %1390 = vmatprep.subr.mxu0 0.0
    %1391 = vmatpush1.msra.mxu0 0.0
    %1392 = vmatprep.mubr.f32.mxu0 0.0
    %1393 = vmatmul.mubr.f32.gmra.mrb[0].mxu0 %v1255
    %v1394 = vpop.f32.mrb[0].mxu0
    %v1395 = vadd.f32 %v1247, %v1394
    %v1396 = vpop.f32.mrb[0].mxu0
    %1397 = vdwg.mxu0
    %v1398 = vadd.f32 %v1136, %v1324
    %v1399 = vxor.u32 %v1398, 2147483648
    %v1400 = vmul.f32 %v1399, 1.442695
    %v1401 = vpow.pop %v1400
    %v1402 = vadd.f32 %v1401, 1.0
    %v1403 = vrcp.pop %v1402
    %v1404 = vmul.f32 1.0, %v1403
    %v1405 = vadd.f32 %v1138, %v1326
    %v1406 = vxor.u32 %v1405, 2147483648
    %v1407 = vmul.f32 %v1406, 1.442695
    %v1408 = vpow.pop %v1407
    %v1409 = vadd.f32 %v1408, 1.0
    %v1410 = vrcp.pop %v1409
    %v1411 = vmul.f32 1.0, %v1410
    %v1412 = vmul.f32 %v1404, %v1395
    %v1413 = vadd.f32 %v1207, %v1412
    %v1414 = vtanh.pop %v1413
    %v1415 = vsub.f32 1.0, %v1411
    %v1416 = vmul.f32 %v1415, %v1414
    %v1418 = vmul.f32 %v1411, %v1253
    %v1419 = vadd.f32 %v1416, %v1418
    %1421 = vrot.lane.b32.xlu0 %v1001, 64
    %v1422 = vpop.permute.xlu0 %1421
    %v1424 = vsel %vm1254, %v1419, %v1422
    %v1425 = vld [vmem:[#allocation7] sm:$0xff]
    %v1426 = vld [vmem:[#allocation7 + $0x8] sm:$0xff]
    %v1427 = vld [vmem:[#allocation7 + $0x10] sm:$0xff]
    %v1428 = vld [vmem:[#allocation7 + $0x18] sm:$0xff]
    %v1429 = vld [vmem:[#allocation7 + $0x20] sm:$0xff]
    %v1430 = vld [vmem:[#allocation7 + $0x28] sm:$0xff]
    %v1431 = vld [vmem:[#allocation7 + $0x30] sm:$0xff]
    %v1432 = vld [vmem:[#allocation7 + $0x38] sm:$0xff]
    %v1433 = vld [vmem:[#allocation7 + $0x40] sm:$0xff]
    %v1434 = vld [vmem:[#allocation7 + $0x48] sm:$0xff]
    %v1435 = vld [vmem:[#allocation7 + $0x50] sm:$0xff]
    %v1436 = vld [vmem:[#allocation7 + $0x58] sm:$0xff]
    %v1437 = vld [vmem:[#allocation7 + $0x60] sm:$0xff]
    %v1438 = vld [vmem:[#allocation7 + $0x68] sm:$0xff]
    %v1439 = vld [vmem:[#allocation7 + $0x70] sm:$0xff]
    %v1440 = vld [vmem:[#allocation7 + $0x78] sm:$0xff]
    %v1441 = vld [vmem:[%s10] sm:$0x1]
    %v1443 = vlaneseq
    %v1444 = vshrl.u32 %v1443, 7
    %v1445 = vsub.s32 0, %v1444
    %v1446 = vrot.slane %v1441, %v1445
    %1448 = vmatprep.subr.mxu0 0.0
    %1449 = vmatpush1.msra.mxu0 %v1425
    %1450 = vmatprep.subr.mxu0 0.0
    %1451 = vmatpush1.msra.mxu0 %v1426
    %1452 = vmatprep.subr.mxu0 0.0
    %1453 = vmatpush1.msra.mxu0 %v1427
    %1454 = vmatprep.subr.mxu0 0.0
    %1455 = vmatpush1.msra.mxu0 %v1428
    %1456 = vmatprep.subr.mxu0 0.0
    %1457 = vmatpush1.msra.mxu0 %v1429
    %1458 = vmatprep.subr.mxu0 0.0
    %1459 = vmatpush1.msra.mxu0 %v1430
    %1460 = vmatprep.subr.mxu0 0.0
    %1461 = vmatpush1.msra.mxu0 %v1431
    %1462 = vmatprep.subr.mxu0 0.0
    %1463 = vmatpush1.msra.mxu0 %v1432
    %1464 = vmatprep.subr.mxu0 0.0
    %1465 = vmatpush1.msra.mxu0 %v1433
    %1466 = vmatprep.subr.mxu0 0.0
    %1467 = vmatpush1.msra.mxu0 %v1434
    %1468 = vmatprep.subr.mxu0 0.0
    %1469 = vmatpush1.msra.mxu0 %v1435
    %1470 = vmatprep.subr.mxu0 0.0
    %1471 = vmatpush1.msra.mxu0 %v1436
    %1472 = vmatprep.subr.mxu0 0.0
    %1473 = vmatpush1.msra.mxu0 %v1437
    %1474 = vmatprep.subr.mxu0 0.0
    %1475 = vmatpush1.msra.mxu0 %v1438
    %1476 = vmatprep.subr.mxu0 0.0
    %1477 = vmatpush1.msra.mxu0 %v1439
    %1478 = vmatprep.subr.mxu0 0.0
    %1479 = vmatpush1.msra.mxu0 %v1440
    %1480 = vmatprep.subr.mxu0 0.0
    %1481 = vmatpush1.msra.mxu0 0.0
    %1482 = vmatprep.subr.mxu0 0.0
    %1483 = vmatpush1.msra.mxu0 0.0
    %1484 = vmatprep.subr.mxu0 0.0
    %1485 = vmatpush1.msra.mxu0 0.0
    %1486 = vmatprep.subr.mxu0 0.0
    %1487 = vmatpush1.msra.mxu0 0.0
    %1488 = vmatprep.subr.mxu0 0.0
    %1489 = vmatpush1.msra.mxu0 0.0
    %1490 = vmatprep.subr.mxu0 0.0
    %1491 = vmatpush1.msra.mxu0 0.0
    %1492 = vmatprep.subr.mxu0 0.0
    %1493 = vmatpush1.msra.mxu0 0.0
    %1494 = vmatprep.subr.mxu0 0.0
    %1495 = vmatpush1.msra.mxu0 0.0
    %1496 = vmatprep.subr.mxu0 0.0
    %1497 = vmatpush1.msra.mxu0 0.0
    %1498 = vmatprep.subr.mxu0 0.0
    %1499 = vmatpush1.msra.mxu0 0.0
    %1500 = vmatprep.subr.mxu0 0.0
    %1501 = vmatpush1.msra.mxu0 0.0
    %1502 = vmatprep.subr.mxu0 0.0
    %1503 = vmatpush1.msra.mxu0 0.0
    %1504 = vmatprep.subr.mxu0 0.0
    %1505 = vmatpush1.msra.mxu0 0.0
    %1506 = vmatprep.subr.mxu0 0.0
    %1507 = vmatpush1.msra.mxu0 0.0
    %1508 = vmatprep.subr.mxu0 0.0
    %1509 = vmatpush1.msra.mxu0 0.0
    %1510 = vmatprep.subr.mxu0 0.0
    %1511 = vmatpush1.msra.mxu0 0.0
    %1512 = vmatprep.mubr.f32.mxu0 0.0
    %1513 = vmatmul.mubr.f32.gmra.mrb[0].mxu0 %v1424
    %v1514 = vpop.f32.mrb[0].mxu0
    %v1515 = vadd.f32 %v1446, %v1514
    %v1516 = vpop.f32.mrb[0].mxu0
    %1517 = vdwg.mxu0
    %v1518 = vsel %vm1254, %v1419, 0.0
    %1519 = vst [vmem:[%s11] sm:$0xff] %v1515
    %1520 = vst [vmem:[%s11 + $0x8] sm:$0xff] %v1518
    // Predicated region
    $region62: #{iam_forward_pallas.1} parent=1 // pred_check
      _
    $region63: #{iam_forward_pallas.1} parent=1 // pred_check_branch
      %1522 = sbr.rel (0) target = $region65
    $region64: #{iam_forward_pallas.1} parent=1 // pred_region
      _
    $region65: #{iam_forward_pallas.1} parent=1 // pred_fallthru
      _
    // Predicated region
    $region66: #{iam_forward_pallas.1} parent=1 // pred_check
      _
    $region67: #{iam_forward_pallas.1} parent=1 // pred_check_branch
      %1524 = sbr.rel (0) target = $region69
    $region68: #{iam_forward_pallas.1} parent=1 // pred_region
      _
    $region69: #{iam_forward_pallas.1} parent=1 // pred_fallthru
      _
    %1525 = vsyncpa [#allocation3], 1
    %1526 = vsyncpa [#allocation5], 1
    %1527 = vsyncpa [#allocation8], 1

</llo_original>
